<compile_context>
chip_gen: v7x
topology: tpu7x:2x2x1
jax: 0.10.0
libtpu: 0.0.40
codegen_flags: <defaults>
</compile_context>

<pallas_src>
import functools
import math

import jax
import jax.numpy as jnp
from jax.experimental import pallas as pl
from jax.experimental.pallas import tpu as pltpu


# ----------------------------------------------------------------------------
# Positional-encoding buffer (mirrors PyTorch __init__; odd d_model handled)
# ----------------------------------------------------------------------------
def make_positional_encoding(d_model: int, max_len: int) -> jnp.ndarray:
    position = jnp.arange(max_len, dtype=jnp.float32)[:, None]              # (L, 1)
    div_term = jnp.exp(
        jnp.arange(0, d_model, 2, dtype=jnp.float32) * (-math.log(10000.0) / d_model)
    )                                                                       # (ceil(D/2),)
    ang = position * div_term                                               # (L, ceil(D/2))
    pe = jnp.zeros((max_len, d_model), dtype=jnp.float32)
    pe = pe.at[:, 0::2].set(jnp.sin(ang))
    pe = pe.at[:, 1::2].set(jnp.cos(ang)[:, : d_model // 2])
    return pe                                                               # (max_len, D)


def _pick_row_tile(rows: int, max_rows: int = 512) -> int:
    """Largest tile <= max_rows that divides `rows` and is a multiple of 8,
    else the full extent (full-extent blocks are always legal)."""
    if rows <= max_rows:
        return rows
    for t in range(max_rows, 7, -8):
        if rows % t == 0:
            return t
    return rows


# ----------------------------------------------------------------------------
# Kernel 1: fused  y = emb * sqrt(D) + pe   (lane-dense, row-tiled, pe broadcast)
# ----------------------------------------------------------------------------
def _embed_scale_pe_kernel(x_ref, pe_ref, o_ref, *, scale):
    o_ref[...] = x_ref[...] * scale + pe_ref[...]


def embed_scale_pe(emb: jnp.ndarray, pe_table: jnp.ndarray) -> jnp.ndarray:
    """emb: (B, S, D) gathered token embeddings; pe_table: (max_len, D)."""
    B, S, D = emb.shape
    scale = math.sqrt(D)
    pe = pe_table[:S].astype(emb.dtype)          # pre-cast to activation dtype

    LANE = 128
    if (S * D) % LANE == 0:
        # lane-dense view: (S, D) rows reflowed to 128-wide rows (unmasked vst)
        R, L = (S * D) // LANE, LANE
        x2 = emb.reshape(B, R, L)
        pe2 = pe.reshape(R, L)
    else:
        R, L = S, D
        x2, pe2 = emb, pe

    tr = _pick_row_tile(R, max_rows=512)          # 512x128xf32 = 256 KiB/block:
    grid = (R // tr, B)                           # fits v5e/v6e/v7x VMEM budgets
    itemsize = jnp.dtype(emb.dtype).itemsize

    y2 = pl.pallas_call(
        functools.partial(_embed_scale_pe_kernel, scale=scale),
        out_shape=jax.ShapeDtypeStruct((B, R, L), emb.dtype),
        grid_spec=pltpu.PrefetchScalarGridSpec(
            num_scalar_prefetch=0,
            grid=grid,                             # batch innermost -> pe DMA skipped
            in_specs=[
                pl.BlockSpec((1, tr, L), lambda r, b: (b, r, 0)),   # x
                pl.BlockSpec((tr, L), lambda r, b: (r, 0)),          # pe (broadcast)
            ],
            out_specs=pl.BlockSpec((1, tr, L), lambda r, b: (b, r, 0)),
        ),
        compiler_params=pltpu.CompilerParams(
            dimension_semantics=("arbitrary", "parallel"),
        ),
        cost_estimate=pl.CostEstimate(
            flops=2 * B * R * L,
            transcendentals=0,
            bytes_accessed=(2 * B * R * L + R * L) * itemsize,
        ),
    )(x2, pe2)
    return y2.reshape(B, S, D)


# ----------------------------------------------------------------------------
# Kernel 2: linear  y = x @ W + b  (+ optional ReLU)
# ----------------------------------------------------------------------------
def _linear_kernel(x_ref, w_ref, b_ref, o_ref, *, activation):
    y = jnp.dot(x_ref[...], w_ref[...], preferred_element_type=jnp.float32)
    y = y + b_ref[...].astype(jnp.float32)
    if activation == "relu":
        y = jnp.maximum(y, 0.0)
    o_ref[...] = y.astype(o_ref.dtype)


def linear(x2d: jnp.ndarray, w: jnp.ndarray, b: jnp.ndarray, activation=None):
    M, K = x2d.shape
    _, N = w.shape
    tm = _pick_row_tile(M, max_rows=256)
    grid = (M // tm,)
    return pl.pallas_call(
        functools.partial(_linear_kernel, activation=activation),
        out_shape=jax.ShapeDtypeStruct((M, N), x2d.dtype),
        grid_spec=pltpu.PrefetchScalarGridSpec(
            num_scalar_prefetch=0,
            grid=grid,
            in_specs=[
                pl.BlockSpec((tm, K), lambda i: (i, 0)),
                pl.BlockSpec((K, N), lambda i: (0, 0)),     # weights resident
                pl.BlockSpec((1, N), lambda i: (0, 0)),
            ],
            out_specs=pl.BlockSpec((tm, N), lambda i: (i, 0)),
        ),
        compiler_params=pltpu.CompilerParams(dimension_semantics=("parallel",)),
    )(x2d, w, b.reshape(1, N))


# ----------------------------------------------------------------------------
# Kernel 3: scaled-dot-product attention core (one batch element per grid step)
# ----------------------------------------------------------------------------
def _mha_core_kernel(q_ref, k_ref, v_ref, mask_ref, o_ref, *, scale):
    q = q_ref[0].astype(jnp.float32)                 # (H, S, dk)
    k = k_ref[0].astype(jnp.float32)
    v = v_ref[0].astype(jnp.float32)
    masked_out = mask_ref[0] == 0                    # (1, 1, S) -> broadcast over keys
    s = jnp.einsum("hqd,hkd->hqk", q, k, preferred_element_type=jnp.float32) / scale
    s = jnp.where(masked_out, -1e10, s)
    s = s - jnp.max(s, axis=-1, keepdims=True)
    p = jnp.exp(s)
    p = p / jnp.sum(p, axis=-1, keepdims=True)
    o = jnp.einsum("hqk,hkd->hqd", p, v, preferred_element_type=jnp.float32)
    o_ref[0] = o.astype(o_ref.dtype)


def mha_core(q, k, v, mask, *, scale):
    B, H, S, dk = q.shape
    qkv_spec = pl.BlockSpec((1, H, S, dk), lambda b: (b, 0, 0, 0))
    return pl.pallas_call(
        functools.partial(_mha_core_kernel, scale=scale),
        out_shape=jax.ShapeDtypeStruct((B, H, S, dk), q.dtype),
        grid_spec=pltpu.PrefetchScalarGridSpec(
            num_scalar_prefetch=0,
            grid=(B,),
            in_specs=[
                qkv_spec, qkv_spec, qkv_spec,
                pl.BlockSpec((1, 1, 1, S), lambda b: (b, 0, 0, 0)),
            ],
            out_specs=qkv_spec,
        ),
        compiler_params=pltpu.CompilerParams(dimension_semantics=("parallel",)),
    )(q, k, v, mask)


# ----------------------------------------------------------------------------
# Kernel 4: fused residual add + LayerNorm over the feature dim
# ----------------------------------------------------------------------------
def _add_layernorm_kernel(x_ref, r_ref, g_ref, b_ref, o_ref, *, eps):
    h = x_ref[...].astype(jnp.float32) + r_ref[...].astype(jnp.float32)
    mean = jnp.mean(h, axis=-1, keepdims=True)
    c = h - mean
    var = jnp.mean(c * c, axis=-1, keepdims=True)
    y = c * jax.lax.rsqrt(var + eps)
    o_ref[...] = (y * g_ref[...].astype(jnp.float32)
                  + b_ref[...].astype(jnp.float32)).astype(o_ref.dtype)


def add_layernorm(x2d, res2d, gamma, beta, eps=1e-5):
    M, D = x2d.shape
    tm = _pick_row_tile(M, max_rows=512)
    grid = (M // tm,)
    return pl.pallas_call(
        functools.partial(_add_layernorm_kernel, eps=eps),
        out_shape=jax.ShapeDtypeStruct((M, D), x2d.dtype),
        grid_spec=pltpu.PrefetchScalarGridSpec(
            num_scalar_prefetch=0,
            grid=grid,
            in_specs=[
                pl.BlockSpec((tm, D), lambda i: (i, 0)),
                pl.BlockSpec((tm, D), lambda i: (i, 0)),
                pl.BlockSpec((1, D), lambda i: (0, 0)),
                pl.BlockSpec((1, D), lambda i: (0, 0)),
            ],
            out_specs=pl.BlockSpec((tm, D), lambda i: (i, 0)),
        ),
        compiler_params=pltpu.CompilerParams(dimension_semantics=("parallel",)),
    )(x2d, res2d, gamma.reshape(1, D), beta.reshape(1, D))


# ----------------------------------------------------------------------------
# Encoder forward (wrapper gluing the kernels; matches the PyTorch module)
# ----------------------------------------------------------------------------
def encoder_layer_forward(src, mask, lp, n_heads):
    B, S, D = src.shape
    dk = D // n_heads
    x2 = src.reshape(B * S, D)

    q = linear(x2, lp["wq"], lp["bq"])
    k = linear(x2, lp["wk"], lp["bk"])
    v = linear(x2, lp["wv"], lp["bv"])

    def split_heads(t):
        return t.reshape(B, S, n_heads, dk).transpose(0, 2, 1, 3)

    ctx = mha_core(split_heads(q), split_heads(k), split_heads(v), mask,
                   scale=math.sqrt(dk))
    ctx2 = ctx.transpose(0, 2, 1, 3).reshape(B * S, D)
    proj = linear(ctx2, lp["wo"], lp["bo"])

    h1 = add_layernorm(x2, proj, lp["ln1_g"], lp["ln1_b"])
    ff = linear(linear(h1, lp["w1"], lp["b1"], activation="relu"), lp["w2"], lp["b2"])
    h2 = add_layernorm(h1, ff, lp["ln2_g"], lp["ln2_b"])
    return h2.reshape(B, S, D)


def encoder_forward(src_ids, src_mask, params, *, n_heads):
    # TODO(synk): token-embedding row gather is data-dependent; done with jnp.take
    # in XLA so it can fuse with neighbors instead of a per-row Pallas DMA gather.
    emb = jnp.take(params["emb"], src_ids, axis=0)              # (B, S, D)
    x = embed_scale_pe(emb, params["pe"])                       # fused *sqrt(D) + PE
    # TODO(synk): nn.Dropout is identity in eval/inference mode; training-mode
    # RNG dropout is not implemented.
    for lp in params["layers"]:
        x = encoder_layer_forward(x, src_mask, lp, n_heads)
    return x


# ----------------------------------------------------------------------------
# Pure-JAX reference (for correctness check)
# ----------------------------------------------------------------------------
def _ref_layernorm(x, g, b, eps=1e-5):
    mean = jnp.mean(x, axis=-1, keepdims=True)
    var = jnp.mean((x - mean) ** 2, axis=-1, keepdims=True)
    return (x - mean) * jax.lax.rsqrt(var + eps) * g + b


def ref_encoder_forward(src_ids, src_mask, params, *, n_heads):
    emb = params["emb"]
    D = emb.shape[1]
    B, S = src_ids.shape
    dk = D // n_heads
    x = jnp.take(emb, src_ids, axis=0) * math.sqrt(D)
    x = x + params["pe"][:S][None, :, :]
    for lp in params["layers"]:
        def lin(t, w, b):
            return t @ w + b
        q = lin(x, lp["wq"], lp["bq"]).reshape(B, S, n_heads, dk).transpose(0, 2, 1, 3)
        k = lin(x, lp["wk"], lp["bk"]).reshape(B, S, n_heads, dk).transpose(0, 2, 1, 3)
        v = lin(x, lp["wv"], lp["bv"]).reshape(B, S, n_heads, dk).transpose(0, 2, 1, 3)
        s = jnp.einsum("bhqd,bhkd->bhqk", q, k) / math.sqrt(dk)
        s = jnp.where(src_mask == 0, -1e10, s)
        p = jax.nn.softmax(s, axis=-1)
        ctx = jnp.einsum("bhqk,bhkd->bhqd", p, v).transpose(0, 2, 1, 3).reshape(B, S, D)
        proj = lin(ctx, lp["wo"], lp["bo"])
        h1 = _ref_layernorm(x + proj, lp["ln1_g"], lp["ln1_b"])
        ff = lin(jnp.maximum(lin(h1, lp["w1"], lp["b1"]), 0.0), lp["w2"], lp["b2"])
        x = _ref_layernorm(h1 + ff, lp["ln2_g"], lp["ln2_b"])
    return x


# ----------------------------------------------------------------------------
# Deterministic parameter init
# ----------------------------------------------------------------------------
def init_params(key, vocab, d_model, n_layers, n_heads, d_ff, max_len):
    k_emb, k_layers = jax.random.split(key)
    emb = jax.random.normal(k_emb, (vocab, d_model), jnp.float32)
    pe = make_positional_encoding(d_model, max_len)

    def dense(k, fan_in, fan_out):
        kw, kb = jax.random.split(k)
        w = jax.random.normal(kw, (fan_in, fan_out), jnp.float32) / math.sqrt(fan_in)
        b = jax.random.normal(kb, (fan_out,), jnp.float32) * 0.02
        return w, b

    layers = []
    for lk in jax.random.split(k_layers, n_layers):
        ks = jax.random.split(lk, 6)
        wq, bq = dense(ks[0], d_model, d_model)
        wk, bk = dense(ks[1], d_model, d_model)
        wv, bv = dense(ks[2], d_model, d_model)
        wo, bo = dense(ks[3], d_model, d_model)
        w1, b1 = dense(ks[4], d_model, d_ff)
        w2, b2 = dense(ks[5], d_ff, d_model)
        layers.append(dict(
            wq=wq, bq=bq, wk=wk, bk=bk, wv=wv, bv=bv, wo=wo, bo=bo,
            ln1_g=jnp.ones((d_model,), jnp.float32),
            ln1_b=jnp.zeros((d_model,), jnp.float32),
            w1=w1, b1=b1, w2=w2, b2=b2,
            ln2_g=jnp.ones((d_model,), jnp.float32),
            ln2_b=jnp.zeros((d_model,), jnp.float32),
        ))
    return dict(emb=emb, pe=pe, layers=layers)


if __name__ == "__main__":
    # Small shapes consistent with the module: B=2, S=8, d_model=32, 4 heads,
    # d_ff=64, 2 layers, vocab=50, max_len=100. Dropout is eval-mode identity.
    VOCAB, D_MODEL, N_LAYERS, N_HEADS, D_FF, MAX_LEN = 50, 32, 2, 4, 64, 100
    B, S = 2, 8

    key = jax.random.PRNGKey(0)
    k_param, k_src = jax.random.split(key)
    params = init_params(k_param, VOCAB, D_MODEL, N_LAYERS, N_HEADS, D_FF, MAX_LEN)

    src_ids = jax.random.randint(k_src, (B, S), 0, VOCAB, dtype=jnp.int32)
    src_mask = jnp.ones((B, 1, 1, S), dtype=jnp.int32)

    fwd = jax.jit(functools.partial(encoder_forward, n_heads=N_HEADS))
    y = jax.block_until_ready(fwd(src_ids, src_mask, params))

    y_ref = ref_encoder_forward(src_ids, src_mask, params, n_heads=N_HEADS)
    assert y.shape == (B, S, D_MODEL)
    assert jnp.allclose(y, y_ref, atol=1e-3, rtol=1e-3), "mismatch vs reference"

    print("KERNEL_OK")
</pallas_src>

<mosaic_0001>
module attributes {stable_mosaic.version = 11 : i64} {
  func.func @_linear_kernel(%arg0: i32, %arg1: memref<16x32xf32, #tpu.memory_space<vmem>>, %arg2: memref<32x32xf32, #tpu.memory_space<vmem>>, %arg3: memref<1x32xf32, #tpu.memory_space<vmem>>, %arg4: memref<16x32xf32, #tpu.memory_space<vmem>>) attributes {dimension_semantics = [#tpu.dimension_semantics<parallel>], iteration_bounds = array<i64: 1>, scalar_prefetch = 0 : i64, scratch_operands = 0 : i64, tpu.core_type = #tpu.core_type<tc>, window_params = [{transform_indices = @transform_0, window_bounds = array<i64: 16, 32>}, {pipeline_mode = #tpu.pipeline_mode<synchronous>, transform_indices = @transform_1, window_bounds = array<i64: 32, 32>}, {pipeline_mode = #tpu.pipeline_mode<synchronous>, transform_indices = @transform_2, window_bounds = array<i64: 1, 32>}, {transform_indices = @transform_3, window_bounds = array<i64: 16, 32>}]} {
    %c0 = arith.constant 0 : index
    %c0_0 = arith.constant 0 : index
    %0 = vector.load %arg1[%c0, %c0_0] : memref<16x32xf32, #tpu.memory_space<vmem>>, vector<16x32xf32>
    %c0_1 = arith.constant 0 : index
    %c0_2 = arith.constant 0 : index
    %1 = vector.load %arg2[%c0_1, %c0_2] : memref<32x32xf32, #tpu.memory_space<vmem>>, vector<32x32xf32>
    %cst = arith.constant dense<0.000000e+00> : vector<16x32xf32>
    %2 = tpu.matmul %0, %1, %cst {dimension_numbers = #tpu.dot_dimension_numbers<[1], [0], [0], [1], [0, 0, 1, 1], [], []>} : vector<16x32xf32>, vector<32x32xf32>, vector<16x32xf32> -> vector<16x32xf32>
    %c0_3 = arith.constant 0 : index
    %c0_4 = arith.constant 0 : index
    %3 = vector.load %arg3[%c0_3, %c0_4] : memref<1x32xf32, #tpu.memory_space<vmem>>, vector<1x32xf32>
    %4 = vector.broadcast %3 : vector<1x32xf32> to vector<16x32xf32>
    %5 = arith.addf %2, %4 : vector<16x32xf32>
    %c0_5 = arith.constant 0 : index
    %c0_6 = arith.constant 0 : index
    %6 = vector.load %arg4[%c0_5, %c0_6] : memref<16x32xf32, #tpu.memory_space<vmem>>, vector<16x32xf32>
    tpu.vector_store %arg4[%c0_5, %c0_6], %5 {strides = array<i32>} : memref<16x32xf32, #tpu.memory_space<vmem>>, vector<16x32xf32>,
    return
  }
  func.func @transform_0(%arg0: i32) -> (i32, i32) {
    %c0_i32 = arith.constant 0 : i32
    %c0_i32_0 = arith.constant 0 : i32
    return %arg0, %c0_i32 : i32, i32
  }
  func.func @transform_1(%arg0: i32) -> (i32, i32) {
    %c0_i32 = arith.constant 0 : i32
    %c0_i32_0 = arith.constant 0 : i32
    %c0_i32_1 = arith.constant 0 : i32
    return %c0_i32, %c0_i32_0 : i32, i32
  }
  func.func @transform_2(%arg0: i32) -> (i32, i32) {
    %c0_i32 = arith.constant 0 : i32
    %c0_i32_0 = arith.constant 0 : i32
    %c0_i32_1 = arith.constant 0 : i32
    return %c0_i32, %c0_i32_0 : i32, i32
  }
  func.func @transform_3(%arg0: i32) -> (i32, i32) {
    %c0_i32 = arith.constant 0 : i32
    %c0_i32_0 = arith.constant 0 : i32
    return %arg0, %c0_i32 : i32, i32
  }
}

module attributes {stable_mosaic.version = 11 : i64} {
  func.func @_embed_scale_pe_kernel(%arg0: i32, %arg1: i32, %arg2: memref<1x2x128xf32, #tpu.memory_space<vmem>>, %arg3: memref<2x128xf32, #tpu.memory_space<vmem>>, %arg4: memref<1x2x128xf32, #tpu.memory_space<vmem>>) attributes {dimension_semantics = [#tpu.dimension_semantics<arbitrary>, #tpu.dimension_semantics<parallel>], iteration_bounds = array<i64: 1, 2>, scalar_prefetch = 0 : i64, scratch_operands = 0 : i64, tpu.core_type = #tpu.core_type<tc>, window_params = [{transform_indices = @transform_0, window_bounds = array<i64: 1, 2, 128>}, {transform_indices = @transform_1, window_bounds = array<i64: 2, 128>}, {transform_indices = @transform_2, window_bounds = array<i64: 1, 2, 128>}]} {
    %c0 = arith.constant 0 : index
    %c0_0 = arith.constant 0 : index
    %c0_1 = arith.constant 0 : index
    %0 = vector.load %arg2[%c0, %c0_0, %c0_1] : memref<1x2x128xf32, #tpu.memory_space<vmem>>, vector<1x2x128xf32>
    %cst = arith.constant 5.65685415 : f32
    %1 = vector.broadcast %cst : f32 to vector<1x2x128xf32>
    %2 = arith.mulf %0, %1 : vector<1x2x128xf32>
    %c0_2 = arith.constant 0 : index
    %c0_3 = arith.constant 0 : index
    %3 = vector.load %arg3[%c0_2, %c0_3] : memref<2x128xf32, #tpu.memory_space<vmem>>, vector<2x128xf32>
    %4 = vector.shape_cast %3 : vector<2x128xf32> to vector<1x2x128xf32>
    %5 = arith.addf %2, %4 : vector<1x2x128xf32>
    %c0_4 = arith.constant 0 : index
    %c0_5 = arith.constant 0 : index
    %c0_6 = arith.constant 0 : index
    %6 = vector.load %arg4[%c0_4, %c0_5, %c0_6] : memref<1x2x128xf32, #tpu.memory_space<vmem>>, vector<1x2x128xf32>
    tpu.vector_store %arg4[%c0_4, %c0_5, %c0_6], %5 {strides = array<i32>} : memref<1x2x128xf32, #tpu.memory_space<vmem>>, vector<1x2x128xf32>,
    return
  }
  func.func @transform_0(%arg0: i32, %arg1: i32) -> (i32, i32, i32) {
    %c0_i32 = arith.constant 0 : i32
    %c0_i32_0 = arith.constant 0 : i32
    return %arg1, %arg0, %c0_i32 : i32, i32, i32
  }
  func.func @transform_1(%arg0: i32, %arg1: i32) -> (i32, i32) {
    %c0_i32 = arith.constant 0 : i32
    %c0_i32_0 = arith.constant 0 : i32
    return %arg0, %c0_i32 : i32, i32
  }
  func.func @transform_2(%arg0: i32, %arg1: i32) -> (i32, i32, i32) {
    %c0_i32 = arith.constant 0 : i32
    %c0_i32_0 = arith.constant 0 : i32
    return %arg1, %arg0, %c0_i32 : i32, i32, i32
  }
}

module attributes {stable_mosaic.version = 11 : i64} {
  func.func @_add_layernorm_kernel(%arg0: i32, %arg1: memref<16x32xf32, #tpu.memory_space<vmem>>, %arg2: memref<16x32xf32, #tpu.memory_space<vmem>>, %arg3: memref<1x32xf32, #tpu.memory_space<vmem>>, %arg4: memref<1x32xf32, #tpu.memory_space<vmem>>, %arg5: memref<16x32xf32, #tpu.memory_space<vmem>>) attributes {dimension_semantics = [#tpu.dimension_semantics<parallel>], iteration_bounds = array<i64: 1>, scalar_prefetch = 0 : i64, scratch_operands = 0 : i64, tpu.core_type = #tpu.core_type<tc>, window_params = [{transform_indices = @transform_0, window_bounds = array<i64: 16, 32>}, {transform_indices = @transform_1, window_bounds = array<i64: 16, 32>}, {pipeline_mode = #tpu.pipeline_mode<synchronous>, transform_indices = @transform_2, window_bounds = array<i64: 1, 32>}, {pipeline_mode = #tpu.pipeline_mode<synchronous>, transform_indices = @transform_3, window_bounds = array<i64: 1, 32>}, {transform_indices = @transform_4, window_bounds = array<i64: 16, 32>}]} {
    %c0 = arith.constant 0 : index
    %c0_0 = arith.constant 0 : index
    %0 = vector.load %arg1[%c0, %c0_0] : memref<16x32xf32, #tpu.memory_space<vmem>>, vector<16x32xf32>
    %c0_1 = arith.constant 0 : index
    %c0_2 = arith.constant 0 : index
    %1 = vector.load %arg2[%c0_1, %c0_2] : memref<16x32xf32, #tpu.memory_space<vmem>>, vector<16x32xf32>
    %2 = arith.addf %0, %1 : vector<16x32xf32>
    %cst = arith.constant dense<0.000000e+00> : vector<16xf32>
    %3 = vector.multi_reduction <add>, %2, %cst [1] : vector<16x32xf32> to vector<16xf32>
    %4 = vector.shape_cast %3 : vector<16xf32> to vector<16x1xf32>
    %cst_3 = arith.constant 3.200000e+01 : f32
    %5 = vector.broadcast %cst_3 : f32 to vector<16x1xf32>
    %6 = arith.divf %4, %5 : vector<16x1xf32>
    %7 = vector.broadcast %6 : vector<16x1xf32> to vector<16x32xf32>
    %8 = arith.subf %2, %7 : vector<16x32xf32>
    %9 = arith.mulf %8, %8 : vector<16x32xf32>
    %cst_4 = arith.constant dense<0.000000e+00> : vector<16xf32>
    %10 = vector.multi_reduction <add>, %9, %cst_4 [1] : vector<16x32xf32> to vector<16xf32>
    %11 = vector.shape_cast %10 : vector<16xf32> to vector<16x1xf32>
    %cst_5 = arith.constant 3.200000e+01 : f32
    %12 = vector.broadcast %cst_5 : f32 to vector<16x1xf32>
    %13 = arith.divf %11, %12 : vector<16x1xf32>
    %cst_6 = arith.constant 9.99999974E-6 : f32
    %14 = vector.broadcast %cst_6 : f32 to vector<16x1xf32>
    %15 = arith.addf %13, %14 : vector<16x1xf32>
    %16 = math.rsqrt %15 : vector<16x1xf32>
    %17 = vector.broadcast %16 : vector<16x1xf32> to vector<16x32xf32>
    %18 = arith.mulf %8, %17 : vector<16x32xf32>
    %c0_7 = arith.constant 0 : index
    %c0_8 = arith.constant 0 : index
    %19 = vector.load %arg3[%c0_7, %c0_8] : memref<1x32xf32, #tpu.memory_space<vmem>>, vector<1x32xf32>
    %20 = vector.broadcast %19 : vector<1x32xf32> to vector<16x32xf32>
    %21 = arith.mulf %18, %20 : vector<16x32xf32>
    %c0_9 = arith.constant 0 : index
    %c0_10 = arith.constant 0 : index
    %22 = vector.load %arg4[%c0_9, %c0_10] : memref<1x32xf32, #tpu.memory_space<vmem>>, vector<1x32xf32>
    %23 = vector.broadcast %22 : vector<1x32xf32> to vector<16x32xf32>
    %24 = arith.addf %21, %23 : vector<16x32xf32>
    %c0_11 = arith.constant 0 : index
    %c0_12 = arith.constant 0 : index
    %25 = vector.load %arg5[%c0_11, %c0_12] : memref<16x32xf32, #tpu.memory_space<vmem>>, vector<16x32xf32>
    tpu.vector_store %arg5[%c0_11, %c0_12], %24 {strides = array<i32>} : memref<16x32xf32, #tpu.memory_space<vmem>>, vector<16x32xf32>,
    return
  }
  func.func @transform_0(%arg0: i32) -> (i32, i32) {
    %c0_i32 = arith.constant 0 : i32
    %c0_i32_0 = arith.constant 0 : i32
    return %arg0, %c0_i32 : i32, i32
  }
  func.func @transform_1(%arg0: i32) -> (i32, i32) {
    %c0_i32 = arith.constant 0 : i32
    %c0_i32_0 = arith.constant 0 : i32
    return %arg0, %c0_i32 : i32, i32
  }
  func.func @transform_2(%arg0: i32) -> (i32, i32) {
    %c0_i32 = arith.constant 0 : i32
    %c0_i32_0 = arith.constant 0 : i32
    %c0_i32_1 = arith.constant 0 : i32
    return %c0_i32, %c0_i32_0 : i32, i32
  }
  func.func @transform_3(%arg0: i32) -> (i32, i32) {
    %c0_i32 = arith.constant 0 : i32
    %c0_i32_0 = arith.constant 0 : i32
    %c0_i32_1 = arith.constant 0 : i32
    return %c0_i32, %c0_i32_0 : i32, i32
  }
  func.func @transform_4(%arg0: i32) -> (i32, i32) {
    %c0_i32 = arith.constant 0 : i32
    %c0_i32_0 = arith.constant 0 : i32
    return %arg0, %c0_i32 : i32, i32
  }
}

module attributes {stable_mosaic.version = 11 : i64} {
  func.func @_mha_core_kernel(%arg0: i32, %arg1: memref<1x4x8x8xf32, #tpu.memory_space<vmem>>, %arg2: memref<1x4x8x8xf32, #tpu.memory_space<vmem>>, %arg3: memref<1x4x8x8xf32, #tpu.memory_space<vmem>>, %arg4: memref<1x1x1x8xi32, #tpu.memory_space<vmem>>, %arg5: memref<1x4x8x8xf32, #tpu.memory_space<vmem>>) attributes {dimension_semantics = [#tpu.dimension_semantics<parallel>], iteration_bounds = array<i64: 2>, scalar_prefetch = 0 : i64, scratch_operands = 0 : i64, tpu.core_type = #tpu.core_type<tc>, window_params = [{transform_indices = @transform_0, window_bounds = array<i64: 1, 4, 8, 8>}, {transform_indices = @transform_1, window_bounds = array<i64: 1, 4, 8, 8>}, {transform_indices = @transform_2, window_bounds = array<i64: 1, 4, 8, 8>}, {transform_indices = @transform_3, window_bounds = array<i64: 1, 1, 1, 8>}, {transform_indices = @transform_4, window_bounds = array<i64: 1, 4, 8, 8>}]} {
    %c0 = arith.constant 0 : index
    %c0_0 = arith.constant 0 : index
    %c0_1 = arith.constant 0 : index
    %c0_2 = arith.constant 0 : index
    %0 = vector.load %arg1[%c0, %c0_0, %c0_1, %c0_2] : memref<1x4x8x8xf32, #tpu.memory_space<vmem>>, vector<1x4x8x8xf32>
    %1 = vector.shape_cast %0 : vector<1x4x8x8xf32> to vector<4x8x8xf32>
    %c0_3 = arith.constant 0 : index
    %c0_4 = arith.constant 0 : index
    %c0_5 = arith.constant 0 : index
    %c0_6 = arith.constant 0 : index
    %2 = vector.load %arg2[%c0_3, %c0_4, %c0_5, %c0_6] : memref<1x4x8x8xf32, #tpu.memory_space<vmem>>, vector<1x4x8x8xf32>
    %3 = vector.shape_cast %2 : vector<1x4x8x8xf32> to vector<4x8x8xf32>
    %c0_7 = arith.constant 0 : index
    %c0_8 = arith.constant 0 : index
    %c0_9 = arith.constant 0 : index
    %c0_10 = arith.constant 0 : index
    %4 = vector.load %arg3[%c0_7, %c0_8, %c0_9, %c0_10] : memref<1x4x8x8xf32, #tpu.memory_space<vmem>>, vector<1x4x8x8xf32>
    %5 = vector.shape_cast %4 : vector<1x4x8x8xf32> to vector<4x8x8xf32>
    %c0_11 = arith.constant 0 : index
    %c0_12 = arith.constant 0 : index
    %c0_13 = arith.constant 0 : index
    %c0_14 = arith.constant 0 : index
    %6 = vector.load %arg4[%c0_11, %c0_12, %c0_13, %c0_14] : memref<1x1x1x8xi32, #tpu.memory_space<vmem>>, vector<1x1x1x8xi32>
    %7 = vector.shape_cast %6 : vector<1x1x1x8xi32> to vector<1x1x8xi32>
    %c0_i32 = arith.constant 0 : i32
    %8 = vector.broadcast %c0_i32 : i32 to vector<1x1x8xi32>
    %9 = arith.cmpi eq, %7, %8 : vector<1x1x8xi32>
    "tpu.trace_start"() <{level = 10 : i32, message = "hqd,hkd->hqk"}> : () -> ()
    %cst = arith.constant dense<0.000000e+00> : vector<4x8x8xf32>
    %10 = tpu.matmul %1, %3, %cst {dimension_numbers = #tpu.dot_dimension_numbers<[2], [2], [1], [1], [0, 0, 0, 1, 1, 1], [0], [0]>} : vector<4x8x8xf32>, vector<4x8x8xf32>, vector<4x8x8xf32> -> vector<4x8x8xf32>
    "tpu.trace_stop"() : () -> ()
    %cst_15 = arith.constant 2.82842708 : f32
    %11 = vector.broadcast %cst_15 : f32 to vector<4x8x8xf32>
    %12 = arith.divf %10, %11 : vector<4x8x8xf32>
    %cst_16 = arith.constant -1.000000e+10 : f32
    %13 = vector.shape_cast %9 : vector<1x1x8xi1> to vector<1x1x8xi1>
    %14 = vector.broadcast %13 : vector<1x1x8xi1> to vector<4x8x8xi1>
    %15 = vector.broadcast %cst_16 : f32 to vector<4x8x8xf32>
    %16 = arith.select %14, %15, %12 : vector<4x8x8xi1>, vector<4x8x8xf32>
    %cst_17 = arith.constant dense<0xFF800000> : vector<4x8xf32>
    %17 = vector.multi_reduction <maximumf>, %16, %cst_17 [2] : vector<4x8x8xf32> to vector<4x8xf32>
    %18 = vector.shape_cast %17 : vector<4x8xf32> to vector<4x8x1xf32>
    %19 = vector.broadcast %18 : vector<4x8x1xf32> to vector<4x8x8xf32>
    %20 = arith.subf %16, %19 : vector<4x8x8xf32>
    %21 = math.exp %20 : vector<4x8x8xf32>
    %cst_18 = arith.constant dense<0.000000e+00> : vector<4x8xf32>
    %22 = vector.multi_reduction <add>, %21, %cst_18 [2] : vector<4x8x8xf32> to vector<4x8xf32>
    %23 = vector.shape_cast %22 : vector<4x8xf32> to vector<4x8x1xf32>
    %24 = vector.broadcast %23 : vector<4x8x1xf32> to vector<4x8x8xf32>
    %25 = arith.divf %21, %24 : vector<4x8x8xf32>
    "tpu.trace_start"() <{level = 10 : i32, message = "hqk,hkd->hqd"}> : () -> ()
    %cst_19 = arith.constant dense<0.000000e+00> : vector<4x8x8xf32>
    %26 = tpu.matmul %25, %5, %cst_19 {dimension_numbers = #tpu.dot_dimension_numbers<[2], [1], [1], [2], [0, 0, 0, 1, 1, 2], [0], [0]>} : vector<4x8x8xf32>, vector<4x8x8xf32>, vector<4x8x8xf32> -> vector<4x8x8xf32>
    "tpu.trace_stop"() : () -> ()
    %c0_20 = arith.constant 0 : index
    %c0_21 = arith.constant 0 : index
    %c0_22 = arith.constant 0 : index
    %c0_23 = arith.constant 0 : index
    %27 = vector.load %arg5[%c0_20, %c0_21, %c0_22, %c0_23] : memref<1x4x8x8xf32, #tpu.memory_space<vmem>>, vector<1x4x8x8xf32>
    %28 = vector.shape_cast %27 : vector<1x4x8x8xf32> to vector<4x8x8xf32>
    %29 = vector.shape_cast %26 : vector<4x8x8xf32> to vector<1x4x8x8xf32>
    tpu.vector_store %arg5[%c0_20, %c0_21, %c0_22, %c0_23], %29 {strides = array<i32>} : memref<1x4x8x8xf32, #tpu.memory_space<vmem>>, vector<1x4x8x8xf32>,
    return
  }
  func.func @transform_0(%arg0: i32) -> (i32, i32, i32, i32) {
    %c0_i32 = arith.constant 0 : i32
    %c0_i32_0 = arith.constant 0 : i32
    %c0_i32_1 = arith.constant 0 : i32
    %c0_i32_2 = arith.constant 0 : i32
    return %arg0, %c0_i32, %c0_i32_0, %c0_i32_1 : i32, i32, i32, i32
  }
  func.func @transform_1(%arg0: i32) -> (i32, i32, i32, i32) {
    %c0_i32 = arith.constant 0 : i32
    %c0_i32_0 = arith.constant 0 : i32
    %c0_i32_1 = arith.constant 0 : i32
    %c0_i32_2 = arith.constant 0 : i32
    return %arg0, %c0_i32, %c0_i32_0, %c0_i32_1 : i32, i32, i32, i32
  }
  func.func @transform_2(%arg0: i32) -> (i32, i32, i32, i32) {
    %c0_i32 = arith.constant 0 : i32
    %c0_i32_0 = arith.constant 0 : i32
    %c0_i32_1 = arith.constant 0 : i32
    %c0_i32_2 = arith.constant 0 : i32
    return %arg0, %c0_i32, %c0_i32_0, %c0_i32_1 : i32, i32, i32, i32
  }
  func.func @transform_3(%arg0: i32) -> (i32, i32, i32, i32) {
    %c0_i32 = arith.constant 0 : i32
    %c0_i32_0 = arith.constant 0 : i32
    %c0_i32_1 = arith.constant 0 : i32
    %c0_i32_2 = arith.constant 0 : i32
    return %arg0, %c0_i32, %c0_i32_0, %c0_i32_1 : i32, i32, i32, i32
  }
  func.func @transform_4(%arg0: i32) -> (i32, i32, i32, i32) {
    %c0_i32 = arith.constant 0 : i32
    %c0_i32_0 = arith.constant 0 : i32
    %c0_i32_1 = arith.constant 0 : i32
    %c0_i32_2 = arith.constant 0 : i32
    return %arg0, %c0_i32, %c0_i32_0, %c0_i32_1 : i32, i32, i32, i32
  }
}

module attributes {stable_mosaic.version = 11 : i64} {
  func.func @_linear_kernel(%arg0: i32, %arg1: memref<16x64xf32, #tpu.memory_space<vmem>>, %arg2: memref<64x32xf32, #tpu.memory_space<vmem>>, %arg3: memref<1x32xf32, #tpu.memory_space<vmem>>, %arg4: memref<16x32xf32, #tpu.memory_space<vmem>>) attributes {dimension_semantics = [#tpu.dimension_semantics<parallel>], iteration_bounds = array<i64: 1>, scalar_prefetch = 0 : i64, scratch_operands = 0 : i64, tpu.core_type = #tpu.core_type<tc>, window_params = [{transform_indices = @transform_0, window_bounds = array<i64: 16, 64>}, {pipeline_mode = #tpu.pipeline_mode<synchronous>, transform_indices = @transform_1, window_bounds = array<i64: 64, 32>}, {pipeline_mode = #tpu.pipeline_mode<synchronous>, transform_indices = @transform_2, window_bounds = array<i64: 1, 32>}, {transform_indices = @transform_3, window_bounds = array<i64: 16, 32>}]} {
    %c0 = arith.constant 0 : index
    %c0_0 = arith.constant 0 : index
    %0 = vector.load %arg1[%c0, %c0_0] : memref<16x64xf32, #tpu.memory_space<vmem>>, vector<16x64xf32>
    %c0_1 = arith.constant 0 : index
    %c0_2 = arith.constant 0 : index
    %1 = vector.load %arg2[%c0_1, %c0_2] : memref<64x32xf32, #tpu.memory_space<vmem>>, vector<64x32xf32>
    %cst = arith.constant dense<0.000000e+00> : vector<16x32xf32>
    %2 = tpu.matmul %0, %1, %cst {dimension_numbers = #tpu.dot_dimension_numbers<[1], [0], [0], [1], [0, 0, 1, 1], [], []>} : vector<16x64xf32>, vector<64x32xf32>, vector<16x32xf32> -> vector<16x32xf32>
    %c0_3 = arith.constant 0 : index
    %c0_4 = arith.constant 0 : index
    %3 = vector.load %arg3[%c0_3, %c0_4] : memref<1x32xf32, #tpu.memory_space<vmem>>, vector<1x32xf32>
    %4 = vector.broadcast %3 : vector<1x32xf32> to vector<16x32xf32>
    %5 = arith.addf %2, %4 : vector<16x32xf32>
    %c0_5 = arith.constant 0 : index
    %c0_6 = arith.constant 0 : index
    %6 = vector.load %arg4[%c0_5, %c0_6] : memref<16x32xf32, #tpu.memory_space<vmem>>, vector<16x32xf32>
    tpu.vector_store %arg4[%c0_5, %c0_6], %5 {strides = array<i32>} : memref<16x32xf32, #tpu.memory_space<vmem>>, vector<16x32xf32>,
    return
  }
  func.func @transform_0(%arg0: i32) -> (i32, i32) {
    %c0_i32 = arith.constant 0 : i32
    %c0_i32_0 = arith.constant 0 : i32
    return %arg0, %c0_i32 : i32, i32
  }
  func.func @transform_1(%arg0: i32) -> (i32, i32) {
    %c0_i32 = arith.constant 0 : i32
    %c0_i32_0 = arith.constant 0 : i32
    %c0_i32_1 = arith.constant 0 : i32
    return %c0_i32, %c0_i32_0 : i32, i32
  }
  func.func @transform_2(%arg0: i32) -> (i32, i32) {
    %c0_i32 = arith.constant 0 : i32
    %c0_i32_0 = arith.constant 0 : i32
    %c0_i32_1 = arith.constant 0 : i32
    return %c0_i32, %c0_i32_0 : i32, i32
  }
  func.func @transform_3(%arg0: i32) -> (i32, i32) {
    %c0_i32 = arith.constant 0 : i32
    %c0_i32_0 = arith.constant 0 : i32
    return %arg0, %c0_i32 : i32, i32
  }
}

module attributes {stable_mosaic.version = 11 : i64} {
  func.func @_add_layernorm_kernel(%arg0: i32, %arg1: memref<16x32xf32, #tpu.memory_space<vmem>>, %arg2: memref<16x32xf32, #tpu.memory_space<vmem>>, %arg3: memref<1x32xf32, #tpu.memory_space<vmem>>, %arg4: memref<1x32xf32, #tpu.memory_space<vmem>>, %arg5: memref<16x32xf32, #tpu.memory_space<vmem>>) attributes {dimension_semantics = [#tpu.dimension_semantics<parallel>], iteration_bounds = array<i64: 1>, scalar_prefetch = 0 : i64, scratch_operands = 0 : i64, tpu.core_type = #tpu.core_type<tc>, window_params = [{transform_indices = @transform_0, window_bounds = array<i64: 16, 32>}, {transform_indices = @transform_1, window_bounds = array<i64: 16, 32>}, {pipeline_mode = #tpu.pipeline_mode<synchronous>, transform_indices = @transform_2, window_bounds = array<i64: 1, 32>}, {pipeline_mode = #tpu.pipeline_mode<synchronous>, transform_indices = @transform_3, window_bounds = array<i64: 1, 32>}, {transform_indices = @transform_4, window_bounds = array<i64: 16, 32>}]} {
    %c0 = arith.constant 0 : index
    %c0_0 = arith.constant 0 : index
    %0 = vector.load %arg1[%c0, %c0_0] : memref<16x32xf32, #tpu.memory_space<vmem>>, vector<16x32xf32>
    %c0_1 = arith.constant 0 : index
    %c0_2 = arith.constant 0 : index
    %1 = vector.load %arg2[%c0_1, %c0_2] : memref<16x32xf32, #tpu.memory_space<vmem>>, vector<16x32xf32>
    %2 = arith.addf %0, %1 : vector<16x32xf32>
    %cst = arith.constant dense<0.000000e+00> : vector<16xf32>
    %3 = vector.multi_reduction <add>, %2, %cst [1] : vector<16x32xf32> to vector<16xf32>
    %4 = vector.shape_cast %3 : vector<16xf32> to vector<16x1xf32>
    %cst_3 = arith.constant 3.200000e+01 : f32
    %5 = vector.broadcast %cst_3 : f32 to vector<16x1xf32>
    %6 = arith.divf %4, %5 : vector<16x1xf32>
    %7 = vector.broadcast %6 : vector<16x1xf32> to vector<16x32xf32>
    %8 = arith.subf %2, %7 : vector<16x32xf32>
    %9 = arith.mulf %8, %8 : vector<16x32xf32>
    %cst_4 = arith.constant dense<0.000000e+00> : vector<16xf32>
    %10 = vector.multi_reduction <add>, %9, %cst_4 [1] : vector<16x32xf32> to vector<16xf32>
    %11 = vector.shape_cast %10 : vector<16xf32> to vector<16x1xf32>
    %cst_5 = arith.constant 3.200000e+01 : f32
    %12 = vector.broadcast %cst_5 : f32 to vector<16x1xf32>
    %13 = arith.divf %11, %12 : vector<16x1xf32>
    %cst_6 = arith.constant 9.99999974E-6 : f32
    %14 = vector.broadcast %cst_6 : f32 to vector<16x1xf32>
    %15 = arith.addf %13, %14 : vector<16x1xf32>
    %16 = math.rsqrt %15 : vector<16x1xf32>
    %17 = vector.broadcast %16 : vector<16x1xf32> to vector<16x32xf32>
    %18 = arith.mulf %8, %17 : vector<16x32xf32>
    %c0_7 = arith.constant 0 : index
    %c0_8 = arith.constant 0 : index
    %19 = vector.load %arg3[%c0_7, %c0_8] : memref<1x32xf32, #tpu.memory_space<vmem>>, vector<1x32xf32>
    %20 = vector.broadcast %19 : vector<1x32xf32> to vector<16x32xf32>
    %21 = arith.mulf %18, %20 : vector<16x32xf32>
    %c0_9 = arith.constant 0 : index
    %c0_10 = arith.constant 0 : index
    %22 = vector.load %arg4[%c0_9, %c0_10] : memref<1x32xf32, #tpu.memory_space<vmem>>, vector<1x32xf32>
    %23 = vector.broadcast %22 : vector<1x32xf32> to vector<16x32xf32>
    %24 = arith.addf %21, %23 : vector<16x32xf32>
    %c0_11 = arith.constant 0 : index
    %c0_12 = arith.constant 0 : index
    %25 = vector.load %arg5[%c0_11, %c0_12] : memref<16x32xf32, #tpu.memory_space<vmem>>, vector<16x32xf32>
    tpu.vector_store %arg5[%c0_11, %c0_12], %24 {strides = array<i32>} : memref<16x32xf32, #tpu.memory_space<vmem>>, vector<16x32xf32>,
    return
  }
  func.func @transform_0(%arg0: i32) -> (i32, i32) {
    %c0_i32 = arith.constant 0 : i32
    %c0_i32_0 = arith.constant 0 : i32
    return %arg0, %c0_i32 : i32, i32
  }
  func.func @transform_1(%arg0: i32) -> (i32, i32) {
    %c0_i32 = arith.constant 0 : i32
    %c0_i32_0 = arith.constant 0 : i32
    return %arg0, %c0_i32 : i32, i32
  }
  func.func @transform_2(%arg0: i32) -> (i32, i32) {
    %c0_i32 = arith.constant 0 : i32
    %c0_i32_0 = arith.constant 0 : i32
    %c0_i32_1 = arith.constant 0 : i32
    return %c0_i32, %c0_i32_0 : i32, i32
  }
  func.func @transform_3(%arg0: i32) -> (i32, i32) {
    %c0_i32 = arith.constant 0 : i32
    %c0_i32_0 = arith.constant 0 : i32
    %c0_i32_1 = arith.constant 0 : i32
    return %c0_i32, %c0_i32_0 : i32, i32
  }
  func.func @transform_4(%arg0: i32) -> (i32, i32) {
    %c0_i32 = arith.constant 0 : i32
    %c0_i32_0 = arith.constant 0 : i32
    return %arg0, %c0_i32 : i32, i32
  }
}

module attributes {stable_mosaic.version = 11 : i64} {
  func.func @_linear_kernel(%arg0: i32, %arg1: memref<16x32xf32, #tpu.memory_space<vmem>>, %arg2: memref<32x64xf32, #tpu.memory_space<vmem>>, %arg3: memref<1x64xf32, #tpu.memory_space<vmem>>, %arg4: memref<16x64xf32, #tpu.memory_space<vmem>>) attributes {dimension_semantics = [#tpu.dimension_semantics<parallel>], iteration_bounds = array<i64: 1>, scalar_prefetch = 0 : i64, scratch_operands = 0 : i64, tpu.core_type = #tpu.core_type<tc>, window_params = [{transform_indices = @transform_0, window_bounds = array<i64: 16, 32>}, {pipeline_mode = #tpu.pipeline_mode<synchronous>, transform_indices = @transform_1, window_bounds = array<i64: 32, 64>}, {pipeline_mode = #tpu.pipeline_mode<synchronous>, transform_indices = @transform_2, window_bounds = array<i64: 1, 64>}, {transform_indices = @transform_3, window_bounds = array<i64: 16, 64>}]} {
    %c0 = arith.constant 0 : index
    %c0_0 = arith.constant 0 : index
    %0 = vector.load %arg1[%c0, %c0_0] : memref<16x32xf32, #tpu.memory_space<vmem>>, vector<16x32xf32>
    %c0_1 = arith.constant 0 : index
    %c0_2 = arith.constant 0 : index
    %1 = vector.load %arg2[%c0_1, %c0_2] : memref<32x64xf32, #tpu.memory_space<vmem>>, vector<32x64xf32>
    %cst = arith.constant dense<0.000000e+00> : vector<16x64xf32>
    %2 = tpu.matmul %0, %1, %cst {dimension_numbers = #tpu.dot_dimension_numbers<[1], [0], [0], [1], [0, 0, 1, 1], [], []>} : vector<16x32xf32>, vector<32x64xf32>, vector<16x64xf32> -> vector<16x64xf32>
    %c0_3 = arith.constant 0 : index
    %c0_4 = arith.constant 0 : index
    %3 = vector.load %arg3[%c0_3, %c0_4] : memref<1x64xf32, #tpu.memory_space<vmem>>, vector<1x64xf32>
    %4 = vector.broadcast %3 : vector<1x64xf32> to vector<16x64xf32>
    %5 = arith.addf %2, %4 : vector<16x64xf32>
    %cst_5 = arith.constant 0.000000e+00 : f32
    %6 = vector.broadcast %cst_5 : f32 to vector<16x64xf32>
    %7 = arith.maximumf %5, %6 : vector<16x64xf32>
    %c0_6 = arith.constant 0 : index
    %c0_7 = arith.constant 0 : index
    %8 = vector.load %arg4[%c0_6, %c0_7] : memref<16x64xf32, #tpu.memory_space<vmem>>, vector<16x64xf32>
    tpu.vector_store %arg4[%c0_6, %c0_7], %7 {strides = array<i32>} : memref<16x64xf32, #tpu.memory_space<vmem>>, vector<16x64xf32>,
    return
  }
  func.func @transform_0(%arg0: i32) -> (i32, i32) {
    %c0_i32 = arith.constant 0 : i32
    %c0_i32_0 = arith.constant 0 : i32
    return %arg0, %c0_i32 : i32, i32
  }
  func.func @transform_1(%arg0: i32) -> (i32, i32) {
    %c0_i32 = arith.constant 0 : i32
    %c0_i32_0 = arith.constant 0 : i32
    %c0_i32_1 = arith.constant 0 : i32
    return %c0_i32, %c0_i32_0 : i32, i32
  }
  func.func @transform_2(%arg0: i32) -> (i32, i32) {
    %c0_i32 = arith.constant 0 : i32
    %c0_i32_0 = arith.constant 0 : i32
    %c0_i32_1 = arith.constant 0 : i32
    return %c0_i32, %c0_i32_0 : i32, i32
  }
  func.func @transform_3(%arg0: i32) -> (i32, i32) {
    %c0_i32 = arith.constant 0 : i32
    %c0_i32_0 = arith.constant 0 : i32
    return %arg0, %c0_i32 : i32, i32
  }
}

</mosaic_0001>

<llo_original>
// kernel: encoder_forward.25
$region0: #{encoder_forward.25}
  #allocation0 [shape = 'u32[]', space=smem, size = 0x4, offset = 0x4, fixed_abs, tag = 'smem constant byte address 0x4 - core index']
  #allocation1 [shape = 'u32[144,128]{1,0:T(1,128)}', space=vmem, size = 0x12000, scoped, tag = 'internal scratch']
  %s0 = inlined_call_operand.vmem [shape: f32[16,32], index: 0, kind: input, shape index: {}]
  %s1 = inlined_call_operand.vmem [shape: f32[16,32], index: 1, kind: input, shape index: {}]
  %s2 = inlined_call_operand.vmem [shape: f32[1,32], index: 2, kind: input, shape index: {}]
  %s3 = inlined_call_operand.vmem [shape: f32[1,32], index: 3, kind: input, shape index: {}]
  %s4 = inlined_call_operand.vmem [shape: f32[16,32], index: 4, kind: output, shape index: {}]
  %s5 = sld [smem:[#allocation0]]
  $region26: #{encoder_forward.25} parent=0
    _
  %s7 = ssub.s32 1, %s5
  %s8 = scalar_select 0, %s7, %s5
  // Predicated region
  $region2: #{encoder_forward.25} parent=0 // pred_check
    _
  $region3: #{encoder_forward.25} parent=0 // pred_check_branch
    %10 = sbr.rel (0) target = $region5
  $region4: #{encoder_forward.25} parent=0 // pred_region
    _
  $region5: #{encoder_forward.25} parent=0 // pred_fallthru
    _
  // Predicated region
  $region6: #{encoder_forward.25} parent=0 // pred_check
    _
  $region7: #{encoder_forward.25} parent=0 // pred_check_branch
    %12 = sbr.rel (0) target = $region9
  $region8: #{encoder_forward.25} parent=0 // pred_region
    _
  $region9: #{encoder_forward.25} parent=0 // pred_fallthru
    _
  // Predicated region
  $region10: #{encoder_forward.25} parent=0 // pred_check
    _
  $region11: #{encoder_forward.25} parent=0 // pred_check_branch
    %14 = sbr.rel (0) target = $region13
  $region12: #{encoder_forward.25} parent=0 // pred_region
    _
  $region13: #{encoder_forward.25} parent=0 // pred_fallthru
    _
  // Predicated region
  $region14: #{encoder_forward.25} parent=0 // pred_check
    _
  $region15: #{encoder_forward.25} parent=0 // pred_check_branch
    %16 = sbr.rel (0) target = $region17
  $region16: #{encoder_forward.25} parent=0 // pred_region
    _
  $region17: #{encoder_forward.25} parent=0 // pred_fallthru
    _
  %v17 = vld [vmem:[%s0] sm:$0xff]
  %v18 = vld [vmem:[%s0 + $0x8] sm:$0xff]
  %v19 = vld [vmem:[%s1] sm:$0xff]
  %v20 = vld [vmem:[%s1 + $0x8] sm:$0xff]
  %v21 = vadd.f32 %v17, %v19
  %v22 = vadd.f32 %v18, %v20
  %vm23 = vcmask 261120
  %v24 = vsel %vm23, %v21, 0.0
  %25 = vadd.xlane.f32.xlu0 %v24
  %v26 = vpop.xlane.xlu0 %25
  %v27 = vsel %vm23, %v22, 0.0
  %28 = vadd.xlane.f32.xlu0 %v27
  %v29 = vpop.xlane.xlu0 %28
  %v30 = vrcp.pop 32.0
  %v31 = vmul.f32 %v26, %v30
  %v32 = vmul.f32 %v29, %v30
  %v33 = vsub.f32 %v21, %v31
  %v34 = vsub.f32 %v22, %v32
  %v35 = vmul.f32 %v33, %v33
  %v36 = vmul.f32 %v34, %v34
  %v37 = vsel %vm23, %v35, 0.0
  %38 = vadd.xlane.f32.xlu0 %v37
  %v39 = vpop.xlane.xlu0 %38
  %v40 = vsel %vm23, %v36, 0.0
  %41 = vadd.xlane.f32.xlu0 %v40
  %v42 = vpop.xlane.xlu0 %41
  %v43 = vmul.f32 %v39, %v30
  %v44 = vmul.f32 %v42, %v30
  %v45 = vadd.f32 %v43, 1e-05
  %v46 = vadd.f32 %v44, 1e-05
  %v47 = vrsqrt.pop %v45
  %v48 = vrsqrt.pop %v46
  %v49 = vmul.f32 %v33, %v47
  %v50 = vmul.f32 %v34, %v48
  %v51 = vld [vmem:[%s2] sm:$0x1]
  %v53 = vlaneseq
  %v54 = vshrl.u32 %v53, 7
  %v55 = vsub.s32 0, %v54
  %v56 = vrot.slane %v51, %v55
  %v58 = vmul.f32 %v49, %v56
  %v59 = vmul.f32 %v50, %v56
  %v60 = vld [vmem:[%s3] sm:$0x1]
  %v62 = vlaneseq
  %v63 = vshrl.u32 %v62, 7
  %v64 = vsub.s32 0, %v63
  %v65 = vrot.slane %v60, %v64
  %v67 = vadd.f32 %v58, %v65
  %v68 = vadd.f32 %v59, %v65
  %69 = vst.msk [vmem:[%s4] sm:$0xff] %vm23, %v67
  %70 = vst.msk [vmem:[%s4 + $0x8] sm:$0xff] %vm23, %v68
  // Predicated region
  $region18: #{encoder_forward.25} parent=0 // pred_check
    _
  $region19: #{encoder_forward.25} parent=0 // pred_check_branch
    %72 = sbr.rel (0) target = $region21
  $region20: #{encoder_forward.25} parent=0 // pred_region
    _
  $region21: #{encoder_forward.25} parent=0 // pred_fallthru
    _
  // Predicated region
  $region22: #{encoder_forward.25} parent=0 // pred_check
    _
  $region23: #{encoder_forward.25} parent=0 // pred_check_branch
    %74 = sbr.rel (0) target = $region25
  $region24: #{encoder_forward.25} parent=0 // pred_region
    _
  $region25: #{encoder_forward.25} parent=0 // pred_fallthru
    _

// kernel: encoder_forward.19
$region0: #{encoder_forward.19}
  #allocation0 [shape = 'u32[]', space=smem, size = 0x4, offset = 0x4, fixed_abs, tag = 'smem constant byte address 0x4 - core index']
  #allocation1 [shape = 'u32[144,128]{1,0:T(1,128)}', space=vmem, size = 0x12000, scoped, tag = 'internal scratch']
  %s0 = inlined_call_operand.vmem [shape: f32[2,2,128], index: 0, kind: input, shape index: {}]
  %s1 = inlined_call_operand.vmem [shape: f32[2,128], index: 1, kind: input, shape index: {}]
  %s2 = inlined_call_operand.vmem [shape: f32[2,2,128], index: 2, kind: output, shape index: {}]
  %s3 = sld [smem:[#allocation0]]
  $region41: #{encoder_forward.19} parent=0
    _
  %s5 = ssub.s32 1, %s3
  %s6 = scalar_select 0, %s5, %s3
  loop: start=0, step=1, limit=4
  $region2: #{encoder_forward.19} parent=0 // loop_pre_header
    _
  $region3: #{encoder_forward.19} parent=0 // loop_header
    %s8 = sphi 0, %s12
    %p9 = scmp.ge.s32.totalorder %s8, 4
    %s15 = sphi 0, %s27
    %s16 = sphi 0, %s23
    %s17 = sphi 0, %s15
    %s18 = sphi 0, %s16
    %s19 = sphi 0, %s17
    %s20 = sphi 0, %s18
    %s32 = sphi 0, %s34
    %s35 = sphi 0, %s32
    %s36 = sphi 0, %s35
    %s52 = sphi 0, %s36
    %s58 = sphi 0, %s60
    %s61 = sphi 0, %s58
    %s62 = sphi 0, %s61
    %s78 = sphi 0, %s62
    %s86 = sphi 0, %s88
    %s89 = sphi 0, %s86
    %s90 = sphi 0, %s89
    %s106 = sphi 0, %s90
  $region4: #{encoder_forward.19} parent=0 // loop_header_branch
    %11 = sbr.rel (%p9) target = $region8
  $region5: #{encoder_forward.19} parent=0 // loop_body
    %s13 = ssub.s32 %s8, 1
    %s14 = ssub.s32 %s8, 2
    %s21 = sadd.s32 1, %s16
    %p22 = scmp.ge.s32.totalorder %s21, 2
    %s23 = scalar_select %p22, 0, %s21
    %s24 = sadd.s32 1, %s15
    %s25 = scalar_select %p22, %s24, %s15
    %p26 = scmp.ge.s32.totalorder %s25, 1
    %s27 = scalar_select %p26, 0, %s25
    %s28 = ssub.s32 %s16, %s23
    %s29 = ssub.s32 %s15, %s27
    %s30 = sor.u32 %s28, %s29
    %p31 = scmp.eq.s32.totalorder %s30, 0
    %s33 = sadd.s32 %s32, 1
    %s34 = scalar_select %p31, %s32, %s33
    %p37 = pneg %p31
    %p38 = scmp.eq.s32.totalorder %s8, 1
    %p39 = por %p37, %p38
    %p40 = scmp.ne.s32.totalorder %s32, %s35
    %p41 = scmp.eq.s32.totalorder %s8, 0
    %p42 = por %p40, %p41
    %p43 = scmp.ne.s32.totalorder %s32, %s35
    %p44 = scmp.eq.s32.totalorder %s13, 1
    %p45 = por %p43, %p44
    %p46 = scmp.ne.s32.totalorder %s35, %s36
    %p47 = scmp.eq.s32.totalorder %s13, 0
    %p48 = por %p46, %p47
    %p49 = scmp.ne.s32.totalorder %s35, %s36
    %p50 = scmp.eq.s32.totalorder %s14, 1
    %p51 = por %p49, %p50
    %p53 = scmp.ne.s32.totalorder %s36, %s52
    %p54 = scmp.eq.s32.totalorder %s14, 0
    %p55 = por %p53, %p54
    %s56 = ssub.s32 %s15, %s27
    %p57 = scmp.eq.s32.totalorder %s56, 0
    %s59 = sadd.s32 %s58, 1
    %s60 = scalar_select %p57, %s58, %s59
    %p63 = pneg %p57
    %p64 = scmp.eq.s32.totalorder %s8, 1
    %p65 = por %p63, %p64
    %p66 = scmp.ne.s32.totalorder %s58, %s61
    %p67 = scmp.eq.s32.totalorder %s8, 0
    %p68 = por %p66, %p67
    %p69 = scmp.ne.s32.totalorder %s58, %s61
    %p70 = scmp.eq.s32.totalorder %s13, 1
    %p71 = por %p69, %p70
    %p72 = scmp.ne.s32.totalorder %s61, %s62
    %p73 = scmp.eq.s32.totalorder %s13, 0
    %p74 = por %p72, %p73
    %p75 = scmp.ne.s32.totalorder %s61, %s62
    %p76 = scmp.eq.s32.totalorder %s14, 1
    %p77 = por %p75, %p76
    %p79 = scmp.ne.s32.totalorder %s62, %s78
    %p80 = scmp.eq.s32.totalorder %s14, 0
    %p81 = por %p79, %p80
    %s82 = ssub.s32 %s16, %s23
    %s83 = ssub.s32 %s15, %s27
    %s84 = sor.u32 %s82, %s83
    %p85 = scmp.eq.s32.totalorder %s84, 0
    %s87 = sadd.s32 %s86, 1
    %s88 = scalar_select %p85, %s86, %s87
    %p91 = pneg %p85
    %p92 = scmp.eq.s32.totalorder %s8, 1
    %p93 = por %p91, %p92
    %p94 = scmp.ne.s32.totalorder %s86, %s89
    %p95 = scmp.eq.s32.totalorder %s8, 0
    %p96 = por %p94, %p95
    %p97 = scmp.ne.s32.totalorder %s86, %s89
    %p98 = scmp.eq.s32.totalorder %s13, 1
    %p99 = por %p97, %p98
    %p100 = scmp.ne.s32.totalorder %s89, %s90
    %p101 = scmp.eq.s32.totalorder %s13, 0
    %p102 = por %p100, %p101
    %p103 = scmp.ne.s32.totalorder %s89, %s90
    %p104 = scmp.eq.s32.totalorder %s14, 1
    %p105 = por %p103, %p104
    %p107 = scmp.ne.s32.totalorder %s90, %s106
    %p108 = scmp.eq.s32.totalorder %s14, 0
    %p109 = por %p107, %p108
    %p110 = scmp.le.s32.totalorder 1, %s8
    %p111 = scmp.lt.s32.totalorder %s8, 3
    %p112 = pnand %p110, %p111
    %p113 = pneg %p112
    // Predicated region
    $region9: #{encoder_forward.19} parent=5 // pred_check
      _
    $region10: #{encoder_forward.19} parent=5 // pred_check_branch
      %115 = sbr.rel (%p112) target = $region12
    $region11: #{encoder_forward.19} parent=5 // pred_region
      %s116 = ssub.s32 %s8, 1
      // Predicated region
      $region13: #{encoder_forward.19} parent=11 // pred_check
        %p117 = pneg %p74
      $region14: #{encoder_forward.19} parent=11 // pred_check_branch
        %119 = sbr.rel (%p117) target = $region16
      $region15: #{encoder_forward.19} parent=11 // pred_region
        %p120 = scmp.lt.s32.totalorder %s17, 0
        %s121 = scalar_select %p120, %s17, 0
        %s122 = smul.addr %s121, 2
        %s123 = scalar_lea.vmem %s1, %s122
      $region16: #{encoder_forward.19} parent=11 // pred_fallthru
        _
    $region12: #{encoder_forward.19} parent=5 // pred_fallthru
      _
    %p124 = scmp.lt.s32.totalorder %s8, 2
    // Predicated region
    $region17: #{encoder_forward.19} parent=5 // pred_check
      %p125 = pneg %p124
    $region18: #{encoder_forward.19} parent=5 // pred_check_branch
      %127 = sbr.rel (%p125) target = $region20
    $region19: #{encoder_forward.19} parent=5 // pred_region
      // Predicated region
      $region21: #{encoder_forward.19} parent=19 // pred_check
        %p128 = pneg %p42
      $region22: #{encoder_forward.19} parent=19 // pred_check_branch
        %130 = sbr.rel (%p128) target = $region24
      $region23: #{encoder_forward.19} parent=19 // pred_region
        %p131 = scmp.lt.s32.totalorder %s16, 1
        %s132 = scalar_select %p131, %s16, 1
        %p133 = scmp.lt.s32.totalorder %s15, 0
        %s134 = scalar_select %p133, %s15, 0
        %s135 = sadd.s32 %s134, %s132
        %s136 = smul.addr %s135, 2
        %s137 = scalar_lea.vmem %s0, %s136
      $region24: #{encoder_forward.19} parent=19 // pred_fallthru
        _
    $region20: #{encoder_forward.19} parent=5 // pred_fallthru
      _
    %p138 = scmp.le.s32.totalorder 1, %s8
    %p139 = scmp.lt.s32.totalorder %s8, 3
    %p140 = pnand %p138, %p139
    %p141 = pneg %p140
    // Predicated region
    $region25: #{encoder_forward.19} parent=5 // pred_check
      _
    $region26: #{encoder_forward.19} parent=5 // pred_check_branch
      %143 = sbr.rel (%p140) target = $region28
    $region27: #{encoder_forward.19} parent=5 // pred_region
      %s144 = ssub.s32 %s8, 1
      %p145 = scmp.lt.s32.totalorder %s18, 1
      %s146 = scalar_select %p145, %s18, 1
      %p147 = scmp.lt.s32.totalorder %s17, 0
      %s148 = scalar_select %p147, %s17, 0
      %s149 = sadd.s32 %s148, %s146
      %s150 = smul.addr %s149, 2
      %s151 = scalar_lea.vmem %s0, %s150
      %p152 = pneg %p48
      %p153 = pneg %p45
      %p154 = scmp.lt.s32.totalorder %s17, 0
      %s155 = scalar_select %p154, %s17, 0
      %s156 = smul.addr %s155, 2
      %s157 = scalar_lea.vmem %s1, %s156
      %p158 = pneg %p74
      %p159 = pneg %p71
      %p160 = pneg %p102
      %p161 = pneg %p99
      %p162 = scmp.lt.s32.totalorder %s18, 1
      %s163 = scalar_select %p162, %s18, 1
      %p164 = scmp.lt.s32.totalorder %s17, 0
      %s165 = scalar_select %p164, %s17, 0
      %s166 = sadd.s32 %s165, %s163
      %s167 = smul.addr %s166, 2
      %s168 = scalar_lea.vmem %s2, %s167
      %p169 = scmp.lt.s32.totalorder %s18, 1
      %s170 = scalar_select %p169, %s18, 1
      %p171 = scmp.lt.s32.totalorder %s17, 0
      %s172 = scalar_select %p171, %s17, 0
      %s173 = sadd.s32 %s172, %s170
      %s174 = smul.addr %s173, 2
      %s175 = scalar_lea.vmem %s0, %s174
      %p176 = scmp.lt.s32.totalorder %s17, 0
      %s177 = scalar_select %p176, %s17, 0
      %s178 = smul.addr %s177, 2
      %s179 = scalar_lea.vmem %s1, %s178
      %p180 = scmp.lt.s32.totalorder %s18, 1
      %s181 = scalar_select %p180, %s18, 1
      %p182 = scmp.lt.s32.totalorder %s17, 0
      %s183 = scalar_select %p182, %s17, 0
      %s184 = sadd.s32 %s183, %s181
      %s185 = smul.addr %s184, 2
      %s186 = scalar_lea.vmem %s2, %s185
      %v187 = vld [vmem:[%s175] sm:$0x3]
      %v188 = vmul.f32 %v187, 5.656854
      %v189 = vld [vmem:[%s179] sm:$0x3]
      %v190 = vadd.f32 %v188, %v189
      %191 = vst [vmem:[%s186] sm:$0x3] %v190
      %p192 = scmp.lt.s32.totalorder %s18, 1
      %s193 = scalar_select %p192, %s18, 1
      %p194 = scmp.lt.s32.totalorder %s17, 0
      %s195 = scalar_select %p194, %s17, 0
      %s196 = sadd.s32 %s195, %s193
      %s197 = smul.addr %s196, 2
      %s198 = scalar_lea.vmem %s2, %s197
      // Predicated region
      $region29: #{encoder_forward.19} parent=27 // pred_check
        %p199 = pneg %p99
      $region30: #{encoder_forward.19} parent=27 // pred_check_branch
        %201 = sbr.rel (%p199) target = $region32
      $region31: #{encoder_forward.19} parent=27 // pred_region
        _
      $region32: #{encoder_forward.19} parent=27 // pred_fallthru
        _
    $region28: #{encoder_forward.19} parent=5 // pred_fallthru
      _
    %p202 = scmp.le.s32.totalorder 2, %s8
    // Predicated region
    $region33: #{encoder_forward.19} parent=5 // pred_check
      %p203 = pneg %p202
    $region34: #{encoder_forward.19} parent=5 // pred_check_branch
      %205 = sbr.rel (%p203) target = $region36
    $region35: #{encoder_forward.19} parent=5 // pred_region
      %s206 = ssub.s32 %s8, 2
      // Predicated region
      $region37: #{encoder_forward.19} parent=35 // pred_check
        %p207 = pneg %p105
      $region38: #{encoder_forward.19} parent=35 // pred_check_branch
        %209 = sbr.rel (%p207) target = $region40
      $region39: #{encoder_forward.19} parent=35 // pred_region
        %p210 = scmp.lt.s32.totalorder %s20, 1
        %s211 = scalar_select %p210, %s20, 1
        %p212 = scmp.lt.s32.totalorder %s19, 0
        %s213 = scalar_select %p212, %s19, 0
        %s214 = sadd.s32 %s213, %s211
        %s215 = smul.addr %s214, 2
        %s216 = scalar_lea.vmem %s2, %s215
      $region40: #{encoder_forward.19} parent=35 // pred_fallthru
        _
    $region36: #{encoder_forward.19} parent=5 // pred_fallthru
      _
  $region6: #{encoder_forward.19} parent=0 // loop_footer
    %s12 = sadd.s32 1, %s8
  $region7: #{encoder_forward.19} parent=0 // loop_footer_branch
    %7 = sbr.rel target = $region3
  $region8: #{encoder_forward.19} parent=0 // loop_exit
    _

// kernel: encoder_forward.21
$region0: #{encoder_forward.21}
  #allocation0 [shape = 'u32[]', space=smem, size = 0x4, offset = 0x4, fixed_abs, tag = 'smem constant byte address 0x4 - core index']
  #allocation1 [shape = 'u32[144,128]{1,0:T(1,128)}', space=vmem, size = 0x12000, scoped, tag = 'internal scratch']
  %s0 = inlined_call_operand.vmem [shape: f32[16,32], index: 0, kind: input, shape index: {}]
  %s1 = inlined_call_operand.vmem [shape: f32[32,32], index: 1, kind: input, shape index: {}]
  %s2 = inlined_call_operand.vmem [shape: f32[1,32], index: 2, kind: input, shape index: {}]
  %s3 = inlined_call_operand.vmem [shape: f32[16,32], index: 3, kind: output, shape index: {}]
  %s4 = sld [smem:[#allocation0]]
  $region22: #{encoder_forward.21} parent=0
    _
  %s6 = ssub.s32 1, %s4
  %s7 = scalar_select 0, %s6, %s4
  // Predicated region
  $region2: #{encoder_forward.21} parent=0 // pred_check
    _
  $region3: #{encoder_forward.21} parent=0 // pred_check_branch
    %9 = sbr.rel (0) target = $region5
  $region4: #{encoder_forward.21} parent=0 // pred_region
    _
  $region5: #{encoder_forward.21} parent=0 // pred_fallthru
    _
  // Predicated region
  $region6: #{encoder_forward.21} parent=0 // pred_check
    _
  $region7: #{encoder_forward.21} parent=0 // pred_check_branch
    %11 = sbr.rel (0) target = $region9
  $region8: #{encoder_forward.21} parent=0 // pred_region
    _
  $region9: #{encoder_forward.21} parent=0 // pred_fallthru
    _
  // Predicated region
  $region10: #{encoder_forward.21} parent=0 // pred_check
    _
  $region11: #{encoder_forward.21} parent=0 // pred_check_branch
    %13 = sbr.rel (0) target = $region13
  $region12: #{encoder_forward.21} parent=0 // pred_region
    _
  $region13: #{encoder_forward.21} parent=0 // pred_fallthru
    _
  %v14 = vld [vmem:[%s0] sm:$0xff]
  %v15 = vld [vmem:[%s0 + $0x8] sm:$0xff]
  %v16 = vld [vmem:[%s1] sm:$0xff]
  %v17 = vld [vmem:[%s1 + $0x8] sm:$0xff]
  %v18 = vld [vmem:[%s1 + $0x10] sm:$0xff]
  %v19 = vld [vmem:[%s1 + $0x18] sm:$0xff]
  %v20 = vld [vmem:[%s2] sm:$0x1]
  %v22 = vlaneseq
  %v23 = vshrl.u32 %v22, 7
  %v24 = vsub.s32 0, %v23
  %v25 = vrot.slane %v20, %v24
  %vm27 = vcmask 261120
  %v29 = vsel %vm27, %v14, 0
  %v32 = vsel %vm27, %v15, 0
  %34 = vmatprep.subr.mxu0 0.0
  %35 = vmatpush1.msra.mxu0 %v16
  %36 = vmatprep.subr.mxu0 0.0
  %37 = vmatpush1.msra.mxu0 %v17
  %38 = vmatprep.subr.mxu0 0.0
  %39 = vmatpush1.msra.mxu0 %v18
  %40 = vmatprep.subr.mxu0 0.0
  %41 = vmatpush1.msra.mxu0 %v19
  %42 = vmatprep.subr.mxu0 0.0
  %43 = vmatpush1.msra.mxu0 0.0
  %44 = vmatprep.subr.mxu0 0.0
  %45 = vmatpush1.msra.mxu0 0.0
  %46 = vmatprep.subr.mxu0 0.0
  %47 = vmatpush1.msra.mxu0 0.0
  %48 = vmatprep.subr.mxu0 0.0
  %49 = vmatpush1.msra.mxu0 0.0
  %50 = vmatprep.subr.mxu0 0.0
  %51 = vmatpush1.msra.mxu0 0.0
  %52 = vmatprep.subr.mxu0 0.0
  %53 = vmatpush1.msra.mxu0 0.0
  %54 = vmatprep.subr.mxu0 0.0
  %55 = vmatpush1.msra.mxu0 0.0
  %56 = vmatprep.subr.mxu0 0.0
  %57 = vmatpush1.msra.mxu0 0.0
  %58 = vmatprep.subr.mxu0 0.0
  %59 = vmatpush1.msra.mxu0 0.0
  %60 = vmatprep.subr.mxu0 0.0
  %61 = vmatpush1.msra.mxu0 0.0
  %62 = vmatprep.subr.mxu0 0.0
  %63 = vmatpush1.msra.mxu0 0.0
  %64 = vmatprep.subr.mxu0 0.0
  %65 = vmatpush1.msra.mxu0 0.0
  %66 = vmatprep.subr.mxu0 0.0
  %67 = vmatpush1.msra.mxu0 0.0
  %68 = vmatprep.subr.mxu0 0.0
  %69 = vmatpush1.msra.mxu0 0.0
  %70 = vmatprep.subr.mxu0 0.0
  %71 = vmatpush1.msra.mxu0 0.0
  %72 = vmatprep.subr.mxu0 0.0
  %73 = vmatpush1.msra.mxu0 0.0
  %74 = vmatprep.subr.mxu0 0.0
  %75 = vmatpush1.msra.mxu0 0.0
  %76 = vmatprep.subr.mxu0 0.0
  %77 = vmatpush1.msra.mxu0 0.0
  %78 = vmatprep.subr.mxu0 0.0
  %79 = vmatpush1.msra.mxu0 0.0
  %80 = vmatprep.subr.mxu0 0.0
  %81 = vmatpush1.msra.mxu0 0.0
  %82 = vmatprep.subr.mxu0 0.0
  %83 = vmatpush1.msra.mxu0 0.0
  %84 = vmatprep.subr.mxu0 0.0
  %85 = vmatpush1.msra.mxu0 0.0
  %86 = vmatprep.subr.mxu0 0.0
  %87 = vmatpush1.msra.mxu0 0.0
  %88 = vmatprep.subr.mxu0 0.0
  %89 = vmatpush1.msra.mxu0 0.0
  %90 = vmatprep.subr.mxu0 0.0
  %91 = vmatpush1.msra.mxu0 0.0
  %92 = vmatprep.subr.mxu0 0.0
  %93 = vmatpush1.msra.mxu0 0.0
  %94 = vmatprep.subr.mxu0 0.0
  %95 = vmatpush1.msra.mxu0 0.0
  %96 = vmatprep.subr.mxu0 0.0
  %97 = vmatpush1.msra.mxu0 0.0
  %98 = vmatprep.mubr.f32.mxu0 0.0
  %99 = vmatmul.mubr.f32.gmra.mrb[0].mxu0 %v29
  %v100 = vpop.f32.mrb[0].mxu0
  %v101 = vadd.f32 %v25, %v100
  %v102 = vpop.f32.mrb[0].mxu0
  %103 = vmatprep.mubr.f32.mxu0 0.0
  %104 = vmatmul.mubr.f32.gmra.mrb[0].mxu0 %v32
  %v105 = vpop.f32.mrb[0].mxu0
  %v106 = vadd.f32 %v25, %v105
  %v107 = vpop.f32.mrb[0].mxu0
  %108 = vdwg.mxu0
  %109 = vst.msk [vmem:[%s3] sm:$0xff] %vm27, %v101
  %110 = vst.msk [vmem:[%s3 + $0x8] sm:$0xff] %vm27, %v106
  // Predicated region
  $region14: #{encoder_forward.21} parent=0 // pred_check
    _
  $region15: #{encoder_forward.21} parent=0 // pred_check_branch
    %112 = sbr.rel (0) target = $region17
  $region16: #{encoder_forward.21} parent=0 // pred_region
    _
  $region17: #{encoder_forward.21} parent=0 // pred_fallthru
    _
  // Predicated region
  $region18: #{encoder_forward.21} parent=0 // pred_check
    _
  $region19: #{encoder_forward.21} parent=0 // pred_check_branch
    %114 = sbr.rel (0) target = $region21
  $region20: #{encoder_forward.21} parent=0 // pred_region
    _
  $region21: #{encoder_forward.21} parent=0 // pred_fallthru
    _

// kernel: encoder_forward.27
$region0: #{encoder_forward.27}
  #allocation0 [shape = 'u32[]', space=smem, size = 0x4, offset = 0x4, fixed_abs, tag = 'smem constant byte address 0x4 - core index']
  #allocation1 [shape = 'u32[144,128]{1,0:T(1,128)}', space=vmem, size = 0x12000, scoped, tag = 'internal scratch']
  %s0 = inlined_call_operand.vmem [shape: f32[16,64], index: 0, kind: input, shape index: {}]
  %s1 = inlined_call_operand.vmem [shape: f32[64,32], index: 1, kind: input, shape index: {}]
  %s2 = inlined_call_operand.vmem [shape: f32[1,32], index: 2, kind: input, shape index: {}]
  %s3 = inlined_call_operand.vmem [shape: f32[16,32], index: 3, kind: output, shape index: {}]
  %s4 = sld [smem:[#allocation0]]
  $region22: #{encoder_forward.27} parent=0
    _
  %s6 = ssub.s32 1, %s4
  %s7 = scalar_select 0, %s6, %s4
  // Predicated region
  $region2: #{encoder_forward.27} parent=0 // pred_check
    _
  $region3: #{encoder_forward.27} parent=0 // pred_check_branch
    %9 = sbr.rel (0) target = $region5
  $region4: #{encoder_forward.27} parent=0 // pred_region
    _
  $region5: #{encoder_forward.27} parent=0 // pred_fallthru
    _
  // Predicated region
  $region6: #{encoder_forward.27} parent=0 // pred_check
    _
  $region7: #{encoder_forward.27} parent=0 // pred_check_branch
    %11 = sbr.rel (0) target = $region9
  $region8: #{encoder_forward.27} parent=0 // pred_region
    _
  $region9: #{encoder_forward.27} parent=0 // pred_fallthru
    _
  // Predicated region
  $region10: #{encoder_forward.27} parent=0 // pred_check
    _
  $region11: #{encoder_forward.27} parent=0 // pred_check_branch
    %13 = sbr.rel (0) target = $region13
  $region12: #{encoder_forward.27} parent=0 // pred_region
    _
  $region13: #{encoder_forward.27} parent=0 // pred_fallthru
    _
  %v14 = vld [vmem:[%s0] sm:$0xff]
  %v15 = vld [vmem:[%s0 + $0x8] sm:$0xff]
  %v16 = vld [vmem:[%s1] sm:$0xff]
  %v17 = vld [vmem:[%s1 + $0x8] sm:$0xff]
  %v18 = vld [vmem:[%s1 + $0x10] sm:$0xff]
  %v19 = vld [vmem:[%s1 + $0x18] sm:$0xff]
  %v20 = vld [vmem:[%s1 + $0x20] sm:$0xff]
  %v21 = vld [vmem:[%s1 + $0x28] sm:$0xff]
  %v22 = vld [vmem:[%s1 + $0x30] sm:$0xff]
  %v23 = vld [vmem:[%s1 + $0x38] sm:$0xff]
  %v24 = vld [vmem:[%s2] sm:$0x1]
  %v26 = vlaneseq
  %v27 = vshrl.u32 %v26, 7
  %v28 = vsub.s32 0, %v27
  %v29 = vrot.slane %v24, %v28
  %vm31 = vcmask 523264
  %v33 = vsel %vm31, %v14, 0
  %v36 = vsel %vm31, %v15, 0
  %38 = vmatprep.subr.mxu0 0.0
  %39 = vmatpush1.msra.mxu0 %v16
  %40 = vmatprep.subr.mxu0 0.0
  %41 = vmatpush1.msra.mxu0 %v17
  %42 = vmatprep.subr.mxu0 0.0
  %43 = vmatpush1.msra.mxu0 %v18
  %44 = vmatprep.subr.mxu0 0.0
  %45 = vmatpush1.msra.mxu0 %v19
  %46 = vmatprep.subr.mxu0 0.0
  %47 = vmatpush1.msra.mxu0 %v20
  %48 = vmatprep.subr.mxu0 0.0
  %49 = vmatpush1.msra.mxu0 %v21
  %50 = vmatprep.subr.mxu0 0.0
  %51 = vmatpush1.msra.mxu0 %v22
  %52 = vmatprep.subr.mxu0 0.0
  %53 = vmatpush1.msra.mxu0 %v23
  %54 = vmatprep.subr.mxu0 0.0
  %55 = vmatpush1.msra.mxu0 0.0
  %56 = vmatprep.subr.mxu0 0.0
  %57 = vmatpush1.msra.mxu0 0.0
  %58 = vmatprep.subr.mxu0 0.0
  %59 = vmatpush1.msra.mxu0 0.0
  %60 = vmatprep.subr.mxu0 0.0
  %61 = vmatpush1.msra.mxu0 0.0
  %62 = vmatprep.subr.mxu0 0.0
  %63 = vmatpush1.msra.mxu0 0.0
  %64 = vmatprep.subr.mxu0 0.0
  %65 = vmatpush1.msra.mxu0 0.0
  %66 = vmatprep.subr.mxu0 0.0
  %67 = vmatpush1.msra.mxu0 0.0
  %68 = vmatprep.subr.mxu0 0.0
  %69 = vmatpush1.msra.mxu0 0.0
  %70 = vmatprep.subr.mxu0 0.0
  %71 = vmatpush1.msra.mxu0 0.0
  %72 = vmatprep.subr.mxu0 0.0
  %73 = vmatpush1.msra.mxu0 0.0
  %74 = vmatprep.subr.mxu0 0.0
  %75 = vmatpush1.msra.mxu0 0.0
  %76 = vmatprep.subr.mxu0 0.0
  %77 = vmatpush1.msra.mxu0 0.0
  %78 = vmatprep.subr.mxu0 0.0
  %79 = vmatpush1.msra.mxu0 0.0
  %80 = vmatprep.subr.mxu0 0.0
  %81 = vmatpush1.msra.mxu0 0.0
  %82 = vmatprep.subr.mxu0 0.0
  %83 = vmatpush1.msra.mxu0 0.0
  %84 = vmatprep.subr.mxu0 0.0
  %85 = vmatpush1.msra.mxu0 0.0
  %86 = vmatprep.subr.mxu0 0.0
  %87 = vmatpush1.msra.mxu0 0.0
  %88 = vmatprep.subr.mxu0 0.0
  %89 = vmatpush1.msra.mxu0 0.0
  %90 = vmatprep.subr.mxu0 0.0
  %91 = vmatpush1.msra.mxu0 0.0
  %92 = vmatprep.subr.mxu0 0.0
  %93 = vmatpush1.msra.mxu0 0.0
  %94 = vmatprep.subr.mxu0 0.0
  %95 = vmatpush1.msra.mxu0 0.0
  %96 = vmatprep.subr.mxu0 0.0
  %97 = vmatpush1.msra.mxu0 0.0
  %98 = vmatprep.subr.mxu0 0.0
  %99 = vmatpush1.msra.mxu0 0.0
  %100 = vmatprep.subr.mxu0 0.0
  %101 = vmatpush1.msra.mxu0 0.0
  %102 = vmatprep.mubr.f32.mxu0 0.0
  %103 = vmatmul.mubr.f32.gmra.mrb[0].mxu0 %v33
  %v104 = vpop.f32.mrb[0].mxu0
  %v105 = vadd.f32 %v29, %v104
  %v106 = vpop.f32.mrb[0].mxu0
  %107 = vmatprep.mubr.f32.mxu0 0.0
  %108 = vmatmul.mubr.f32.gmra.mrb[0].mxu0 %v36
  %v109 = vpop.f32.mrb[0].mxu0
  %v110 = vadd.f32 %v29, %v109
  %v111 = vpop.f32.mrb[0].mxu0
  %112 = vdwg.mxu0
  %vm113 = vcmask 261120
  %114 = vst.msk [vmem:[%s3] sm:$0xff] %vm113, %v105
  %115 = vst.msk [vmem:[%s3 + $0x8] sm:$0xff] %vm113, %v110
  // Predicated region
  $region14: #{encoder_forward.27} parent=0 // pred_check
    _
  $region15: #{encoder_forward.27} parent=0 // pred_check_branch
    %117 = sbr.rel (0) target = $region17
  $region16: #{encoder_forward.27} parent=0 // pred_region
    _
  $region17: #{encoder_forward.27} parent=0 // pred_fallthru
    _
  // Predicated region
  $region18: #{encoder_forward.27} parent=0 // pred_check
    _
  $region19: #{encoder_forward.27} parent=0 // pred_check_branch
    %119 = sbr.rel (0) target = $region21
  $region20: #{encoder_forward.27} parent=0 // pred_region
    _
  $region21: #{encoder_forward.27} parent=0 // pred_fallthru
    _

// kernel: encoder_forward.23
$region0: #{encoder_forward.23}
  #allocation0 [shape = 'u32[]', space=smem, size = 0x4, offset = 0x4, fixed_abs, tag = 'smem constant byte address 0x4 - core index']
  #allocation1 [shape = 'u32[144,128]{1,0:T(1,128)}', space=vmem, size = 0x12000, scoped, tag = 'internal scratch']
  %s0 = inlined_call_operand.vmem [shape: f32[2,4,8,8], index: 0, kind: input, shape index: {}]
  %s1 = inlined_call_operand.vmem [shape: f32[2,4,8,8], index: 1, kind: input, shape index: {}]
  %s2 = inlined_call_operand.vmem [shape: f32[2,4,8,8], index: 2, kind: input, shape index: {}]
  %s3 = inlined_call_operand.vmem [shape: s32[2,1,1,8], index: 3, kind: input, shape index: {}]
  %s4 = inlined_call_operand.vmem [shape: f32[2,4,8,8], index: 4, kind: output, shape index: {}]
  %s5 = sld [smem:[#allocation0]]
  $region49: #{encoder_forward.23} parent=0
    _
  %s7 = ssub.s32 1, %s5
  %s8 = scalar_select 0, %s7, %s5
  loop: start=0, step=1, limit=4
  $region2: #{encoder_forward.23} parent=0 // loop_pre_header
    _
  $region3: #{encoder_forward.23} parent=0 // loop_header
    %s10 = sphi 0, %s14
    %p11 = scmp.ge.s32.totalorder %s10, 4
    %s20 = sphi 0, %s22
    %s23 = sphi 0, %s20
    %s24 = sphi 0, %s23
    %s40 = sphi 0, %s24
    %s46 = sphi 0, %s48
    %s49 = sphi 0, %s46
    %s50 = sphi 0, %s49
    %s66 = sphi 0, %s50
    %s72 = sphi 0, %s74
    %s75 = sphi 0, %s72
    %s76 = sphi 0, %s75
    %s92 = sphi 0, %s76
    %s98 = sphi 0, %s100
    %s101 = sphi 0, %s98
    %s102 = sphi 0, %s101
    %s118 = sphi 0, %s102
    %s124 = sphi 0, %s126
    %s127 = sphi 0, %s124
    %s128 = sphi 0, %s127
    %s144 = sphi 0, %s128
  $region4: #{encoder_forward.23} parent=0 // loop_header_branch
    %13 = sbr.rel (%p11) target = $region8
  $region5: #{encoder_forward.23} parent=0 // loop_body
    %s15 = ssub.s32 %s10, 1
    %s16 = ssub.s32 %s10, 2
    %s17 = sadd.s32 %s10, 1
    %s18 = ssub.s32 %s10, %s17
    %p19 = scmp.eq.s32.totalorder %s18, 0
    %s21 = sadd.s32 %s20, 1
    %s22 = scalar_select %p19, %s20, %s21
    %p25 = pneg %p19
    %p26 = scmp.eq.s32.totalorder %s10, 1
    %p27 = por %p25, %p26
    %p28 = scmp.ne.s32.totalorder %s20, %s23
    %p29 = scmp.eq.s32.totalorder %s10, 0
    %p30 = por %p28, %p29
    %p31 = scmp.ne.s32.totalorder %s20, %s23
    %p32 = scmp.eq.s32.totalorder %s15, 1
    %p33 = por %p31, %p32
    %p34 = scmp.ne.s32.totalorder %s23, %s24
    %p35 = scmp.eq.s32.totalorder %s15, 0
    %p36 = por %p34, %p35
    %p37 = scmp.ne.s32.totalorder %s23, %s24
    %p38 = scmp.eq.s32.totalorder %s16, 1
    %p39 = por %p37, %p38
    %p41 = scmp.ne.s32.totalorder %s24, %s40
    %p42 = scmp.eq.s32.totalorder %s16, 0
    %p43 = por %p41, %p42
    %s44 = ssub.s32 %s10, %s17
    %p45 = scmp.eq.s32.totalorder %s44, 0
    %s47 = sadd.s32 %s46, 1
    %s48 = scalar_select %p45, %s46, %s47
    %p51 = pneg %p45
    %p52 = scmp.eq.s32.totalorder %s10, 1
    %p53 = por %p51, %p52
    %p54 = scmp.ne.s32.totalorder %s46, %s49
    %p55 = scmp.eq.s32.totalorder %s10, 0
    %p56 = por %p54, %p55
    %p57 = scmp.ne.s32.totalorder %s46, %s49
    %p58 = scmp.eq.s32.totalorder %s15, 1
    %p59 = por %p57, %p58
    %p60 = scmp.ne.s32.totalorder %s49, %s50
    %p61 = scmp.eq.s32.totalorder %s15, 0
    %p62 = por %p60, %p61
    %p63 = scmp.ne.s32.totalorder %s49, %s50
    %p64 = scmp.eq.s32.totalorder %s16, 1
    %p65 = por %p63, %p64
    %p67 = scmp.ne.s32.totalorder %s50, %s66
    %p68 = scmp.eq.s32.totalorder %s16, 0
    %p69 = por %p67, %p68
    %s70 = ssub.s32 %s10, %s17
    %p71 = scmp.eq.s32.totalorder %s70, 0
    %s73 = sadd.s32 %s72, 1
    %s74 = scalar_select %p71, %s72, %s73
    %p77 = pneg %p71
    %p78 = scmp.eq.s32.totalorder %s10, 1
    %p79 = por %p77, %p78
    %p80 = scmp.ne.s32.totalorder %s72, %s75
    %p81 = scmp.eq.s32.totalorder %s10, 0
    %p82 = por %p80, %p81
    %p83 = scmp.ne.s32.totalorder %s72, %s75
    %p84 = scmp.eq.s32.totalorder %s15, 1
    %p85 = por %p83, %p84
    %p86 = scmp.ne.s32.totalorder %s75, %s76
    %p87 = scmp.eq.s32.totalorder %s15, 0
    %p88 = por %p86, %p87
    %p89 = scmp.ne.s32.totalorder %s75, %s76
    %p90 = scmp.eq.s32.totalorder %s16, 1
    %p91 = por %p89, %p90
    %p93 = scmp.ne.s32.totalorder %s76, %s92
    %p94 = scmp.eq.s32.totalorder %s16, 0
    %p95 = por %p93, %p94
    %s96 = ssub.s32 %s10, %s17
    %p97 = scmp.eq.s32.totalorder %s96, 0
    %s99 = sadd.s32 %s98, 1
    %s100 = scalar_select %p97, %s98, %s99
    %p103 = pneg %p97
    %p104 = scmp.eq.s32.totalorder %s10, 1
    %p105 = por %p103, %p104
    %p106 = scmp.ne.s32.totalorder %s98, %s101
    %p107 = scmp.eq.s32.totalorder %s10, 0
    %p108 = por %p106, %p107
    %p109 = scmp.ne.s32.totalorder %s98, %s101
    %p110 = scmp.eq.s32.totalorder %s15, 1
    %p111 = por %p109, %p110
    %p112 = scmp.ne.s32.totalorder %s101, %s102
    %p113 = scmp.eq.s32.totalorder %s15, 0
    %p114 = por %p112, %p113
    %p115 = scmp.ne.s32.totalorder %s101, %s102
    %p116 = scmp.eq.s32.totalorder %s16, 1
    %p117 = por %p115, %p116
    %p119 = scmp.ne.s32.totalorder %s102, %s118
    %p120 = scmp.eq.s32.totalorder %s16, 0
    %p121 = por %p119, %p120
    %s122 = ssub.s32 %s10, %s17
    %p123 = scmp.eq.s32.totalorder %s122, 0
    %s125 = sadd.s32 %s124, 1
    %s126 = scalar_select %p123, %s124, %s125
    %p129 = pneg %p123
    %p130 = scmp.eq.s32.totalorder %s10, 1
    %p131 = por %p129, %p130
    %p132 = scmp.ne.s32.totalorder %s124, %s127
    %p133 = scmp.eq.s32.totalorder %s10, 0
    %p134 = por %p132, %p133
    %p135 = scmp.ne.s32.totalorder %s124, %s127
    %p136 = scmp.eq.s32.totalorder %s15, 1
    %p137 = por %p135, %p136
    %p138 = scmp.ne.s32.totalorder %s127, %s128
    %p139 = scmp.eq.s32.totalorder %s15, 0
    %p140 = por %p138, %p139
    %p141 = scmp.ne.s32.totalorder %s127, %s128
    %p142 = scmp.eq.s32.totalorder %s16, 1
    %p143 = por %p141, %p142
    %p145 = scmp.ne.s32.totalorder %s128, %s144
    %p146 = scmp.eq.s32.totalorder %s16, 0
    %p147 = por %p145, %p146
    %p148 = scmp.le.s32.totalorder 1, %s10
    %p149 = scmp.lt.s32.totalorder %s10, 3
    %p150 = pnand %p148, %p149
    %p151 = pneg %p150
    // Predicated region
    $region9: #{encoder_forward.23} parent=5 // pred_check
      _
    $region10: #{encoder_forward.23} parent=5 // pred_check_branch
      %153 = sbr.rel (%p150) target = $region12
    $region11: #{encoder_forward.23} parent=5 // pred_region
      %s154 = ssub.s32 %s10, 1
    $region12: #{encoder_forward.23} parent=5 // pred_fallthru
      _
    %p155 = scmp.lt.s32.totalorder %s10, 2
    // Predicated region
    $region13: #{encoder_forward.23} parent=5 // pred_check
      %p156 = pneg %p155
    $region14: #{encoder_forward.23} parent=5 // pred_check_branch
      %158 = sbr.rel (%p156) target = $region16
    $region15: #{encoder_forward.23} parent=5 // pred_region
      // Predicated region
      $region17: #{encoder_forward.23} parent=15 // pred_check
        %p159 = pneg %p30
      $region18: #{encoder_forward.23} parent=15 // pred_check_branch
        %161 = sbr.rel (%p159) target = $region20
      $region19: #{encoder_forward.23} parent=15 // pred_region
        %p162 = scmp.lt.s32.totalorder %s10, 1
        %s163 = scalar_select %p162, %s10, 1
        %s164 = smul.addr %s163, 4
        %s165 = smul.addr %s164, 8
        %s166 = scalar_lea.vmem %s0, %s165
      $region20: #{encoder_forward.23} parent=15 // pred_fallthru
        _
      // Predicated region
      $region21: #{encoder_forward.23} parent=15 // pred_check
        %p167 = pneg %p56
      $region22: #{encoder_forward.23} parent=15 // pred_check_branch
        %169 = sbr.rel (%p167) target = $region24
      $region23: #{encoder_forward.23} parent=15 // pred_region
        %p170 = scmp.lt.s32.totalorder %s10, 1
        %s171 = scalar_select %p170, %s10, 1
        %s172 = smul.addr %s171, 4
        %s173 = smul.addr %s172, 8
        %s174 = scalar_lea.vmem %s1, %s173
      $region24: #{encoder_forward.23} parent=15 // pred_fallthru
        _
      // Predicated region
      $region25: #{encoder_forward.23} parent=15 // pred_check
        %p175 = pneg %p82
      $region26: #{encoder_forward.23} parent=15 // pred_check_branch
        %177 = sbr.rel (%p175) target = $region28
      $region27: #{encoder_forward.23} parent=15 // pred_region
        %p178 = scmp.lt.s32.totalorder %s10, 1
        %s179 = scalar_select %p178, %s10, 1
        %s180 = smul.addr %s179, 4
        %s181 = smul.addr %s180, 8
        %s182 = scalar_lea.vmem %s2, %s181
      $region28: #{encoder_forward.23} parent=15 // pred_fallthru
        _
      // Predicated region
      $region29: #{encoder_forward.23} parent=15 // pred_check
        %p183 = pneg %p108
      $region30: #{encoder_forward.23} parent=15 // pred_check_branch
        %185 = sbr.rel (%p183) target = $region32
      $region31: #{encoder_forward.23} parent=15 // pred_region
        %p186 = scmp.lt.s32.totalorder %s10, 1
        %s187 = scalar_select %p186, %s10, 1
        %s188 = scalar_lea.vmem %s3, %s187
      $region32: #{encoder_forward.23} parent=15 // pred_fallthru
        _
    $region16: #{encoder_forward.23} parent=5 // pred_fallthru
      _
    %p189 = scmp.le.s32.totalorder 1, %s10
    %p190 = scmp.lt.s32.totalorder %s10, 3
    %p191 = pnand %p189, %p190
    %p192 = pneg %p191
    // Predicated region
    $region33: #{encoder_forward.23} parent=5 // pred_check
      _
    $region34: #{encoder_forward.23} parent=5 // pred_check_branch
      %194 = sbr.rel (%p191) target = $region36
    $region35: #{encoder_forward.23} parent=5 // pred_region
      %s195 = ssub.s32 %s10, 1
      %p196 = scmp.lt.s32.totalorder %s15, 1
      %s197 = scalar_select %p196, %s15, 1
      %s198 = smul.addr %s197, 4
      %s199 = smul.addr %s198, 8
      %s200 = scalar_lea.vmem %s0, %s199
      %p201 = pneg %p36
      %p202 = pneg %p33
      %p203 = scmp.lt.s32.totalorder %s15, 1
      %s204 = scalar_select %p203, %s15, 1
      %s205 = smul.addr %s204, 4
      %s206 = smul.addr %s205, 8
      %s207 = scalar_lea.vmem %s1, %s206
      %p208 = pneg %p62
      %p209 = pneg %p59
      %p210 = scmp.lt.s32.totalorder %s15, 1
      %s211 = scalar_select %p210, %s15, 1
      %s212 = smul.addr %s211, 4
      %s213 = smul.addr %s212, 8
      %s214 = scalar_lea.vmem %s2, %s213
      %p215 = pneg %p88
      %p216 = pneg %p85
      %p217 = scmp.lt.s32.totalorder %s15, 1
      %s218 = scalar_select %p217, %s15, 1
      %s219 = scalar_lea.vmem %s3, %s218
      %p220 = pneg %p114
      %p221 = pneg %p111
      %p222 = pneg %p140
      %p223 = pneg %p137
      %p224 = scmp.lt.s32.totalorder %s15, 1
      %s225 = scalar_select %p224, %s15, 1
      %s226 = smul.addr %s225, 4
      %s227 = smul.addr %s226, 8
      %s228 = scalar_lea.vmem %s4, %s227
      %p229 = scmp.lt.s32.totalorder %s15, 1
      %s230 = scalar_select %p229, %s15, 1
      %s231 = smul.addr %s230, 4
      %s232 = smul.addr %s231, 8
      %s233 = scalar_lea.vmem %s0, %s232
      %p234 = scmp.lt.s32.totalorder %s15, 1
      %s235 = scalar_select %p234, %s15, 1
      %s236 = smul.addr %s235, 4
      %s237 = smul.addr %s236, 8
      %s238 = scalar_lea.vmem %s1, %s237
      %p239 = scmp.lt.s32.totalorder %s15, 1
      %s240 = scalar_select %p239, %s15, 1
      %s241 = smul.addr %s240, 4
      %s242 = smul.addr %s241, 8
      %s243 = scalar_lea.vmem %s2, %s242
      %p244 = scmp.lt.s32.totalorder %s15, 1
      %s245 = scalar_select %p244, %s15, 1
      %s246 = scalar_lea.vmem %s3, %s245
      %p247 = scmp.lt.s32.totalorder %s15, 1
      %s248 = scalar_select %p247, %s15, 1
      %s249 = smul.addr %s248, 4
      %s250 = smul.addr %s249, 8
      %s251 = scalar_lea.vmem %s4, %s250
      %v252 = vld [vmem:[%s233] sm:$0xff]
      %v253 = vld [vmem:[%s233 + $0x8] sm:$0xff]
      %v254 = vld [vmem:[%s233 + $0x10] sm:$0xff]
      %v255 = vld [vmem:[%s233 + $0x18] sm:$0xff]
      %v256 = vld [vmem:[%s238] sm:$0xff]
      %v257 = vld [vmem:[%s238 + $0x8] sm:$0xff]
      %v258 = vld [vmem:[%s238 + $0x10] sm:$0xff]
      %v259 = vld [vmem:[%s238 + $0x18] sm:$0xff]
      %v260 = vld [vmem:[%s243] sm:$0xff]
      %v261 = vld [vmem:[%s243 + $0x8] sm:$0xff]
      %v262 = vld [vmem:[%s243 + $0x10] sm:$0xff]
      %v263 = vld [vmem:[%s243 + $0x18] sm:$0xff]
      %v264 = vld [vmem:[%s246] sm:$0x1]
      %vm265 = vcmp.eq.s32.totalorder %v264, 0
      %vm266 = vcmask 64512
      %v268 = vsel %vm266, %v252, 0
      %v271 = vsel %vm266, %v256, 0
      %273 = vmatprep.subr.mxu0 0.0
      %274 = vmatpush1.xpose.msra.mxu0 %v271
      %275 = vmatprep.subr.mxu0 0.0
      %276 = vmatpush1.xpose.msra.mxu0 0.0
      %277 = vmatprep.subr.mxu0 0.0
      %278 = vmatpush1.xpose.msra.mxu0 0.0
      %279 = vmatprep.subr.mxu0 0.0
      %280 = vmatpush1.xpose.msra.mxu0 0.0
      %281 = vmatprep.subr.mxu0 0.0
      %282 = vmatpush1.xpose.msra.mxu0 0.0
      %283 = vmatprep.subr.mxu0 0.0
      %284 = vmatpush1.xpose.msra.mxu0 0.0
      %285 = vmatprep.subr.mxu0 0.0
      %286 = vmatpush1.xpose.msra.mxu0 0.0
      %287 = vmatprep.subr.mxu0 0.0
      %288 = vmatpush1.xpose.msra.mxu0 0.0
      %289 = vmatprep.subr.mxu0 0.0
      %290 = vmatpush1.xpose.msra.mxu0 0.0
      %291 = vmatprep.subr.mxu0 0.0
      %292 = vmatpush1.xpose.msra.mxu0 0.0
      %293 = vmatprep.subr.mxu0 0.0
      %294 = vmatpush1.xpose.msra.mxu0 0.0
      %295 = vmatprep.subr.mxu0 0.0
      %296 = vmatpush1.xpose.msra.mxu0 0.0
      %297 = vmatprep.subr.mxu0 0.0
      %298 = vmatpush1.xpose.msra.mxu0 0.0
      %299 = vmatprep.subr.mxu0 0.0
      %300 = vmatpush1.xpose.msra.mxu0 0.0
      %301 = vmatprep.subr.mxu0 0.0
      %302 = vmatpush1.xpose.msra.mxu0 0.0
      %303 = vmatprep.subr.mxu0 0.0
      %304 = vmatpush1.xpose.msra.mxu0 0.0
      %305 = vmatprep.subr.mxu0 0.0
      %306 = vmatpush1.xpose.msra.mxu0 0.0
      %307 = vmatprep.subr.mxu0 0.0
      %308 = vmatpush1.xpose.msra.mxu0 0.0
      %309 = vmatprep.subr.mxu0 0.0
      %310 = vmatpush1.xpose.msra.mxu0 0.0
      %311 = vmatprep.subr.mxu0 0.0
      %312 = vmatpush1.xpose.msra.mxu0 0.0
      %313 = vmatprep.subr.mxu0 0.0
      %314 = vmatpush1.xpose.msra.mxu0 0.0
      %315 = vmatprep.subr.mxu0 0.0
      %316 = vmatpush1.xpose.msra.mxu0 0.0
      %317 = vmatprep.subr.mxu0 0.0
      %318 = vmatpush1.xpose.msra.mxu0 0.0
      %319 = vmatprep.subr.mxu0 0.0
      %320 = vmatpush1.xpose.msra.mxu0 0.0
      %321 = vmatprep.subr.mxu0 0.0
      %322 = vmatpush1.xpose.msra.mxu0 0.0
      %323 = vmatprep.subr.mxu0 0.0
      %324 = vmatpush1.xpose.msra.mxu0 0.0
      %325 = vmatprep.subr.mxu0 0.0
      %326 = vmatpush1.xpose.msra.mxu0 0.0
      %327 = vmatprep.subr.mxu0 0.0
      %328 = vmatpush1.xpose.msra.mxu0 0.0
      %329 = vmatprep.subr.mxu0 0.0
      %330 = vmatpush1.xpose.msra.mxu0 0.0
      %331 = vmatprep.subr.mxu0 0.0
      %332 = vmatpush1.xpose.msra.mxu0 0.0
      %333 = vmatprep.subr.mxu0 0.0
      %334 = vmatpush1.xpose.msra.mxu0 0.0
      %335 = vmatprep.subr.mxu0 0.0
      %336 = vmatpush1.xpose.msra.mxu0 0.0
      %337 = vmatprep.mubr.f32.mxu0 0.0
      %338 = vmatmul.mubr.f32.gmra.mrb[0].mxu0 %v268
      %v339 = vpop.f32.mrb[0].mxu0
      %v340 = vadd.f32 0.0, %v339
      %v341 = vpop.f32.mrb[0].mxu0
      %342 = vdwg.mxu0
      %v344 = vsel %vm266, %v253, 0
      %v347 = vsel %vm266, %v257, 0
      %349 = vmatprep.subr.mxu0 0.0
      %350 = vmatpush1.xpose.msra.mxu0 %v347
      %351 = vmatprep.subr.mxu0 0.0
      %352 = vmatpush1.xpose.msra.mxu0 0.0
      %353 = vmatprep.subr.mxu0 0.0
      %354 = vmatpush1.xpose.msra.mxu0 0.0
      %355 = vmatprep.subr.mxu0 0.0
      %356 = vmatpush1.xpose.msra.mxu0 0.0
      %357 = vmatprep.subr.mxu0 0.0
      %358 = vmatpush1.xpose.msra.mxu0 0.0
      %359 = vmatprep.subr.mxu0 0.0
      %360 = vmatpush1.xpose.msra.mxu0 0.0
      %361 = vmatprep.subr.mxu0 0.0
      %362 = vmatpush1.xpose.msra.mxu0 0.0
      %363 = vmatprep.subr.mxu0 0.0
      %364 = vmatpush1.xpose.msra.mxu0 0.0
      %365 = vmatprep.subr.mxu0 0.0
      %366 = vmatpush1.xpose.msra.mxu0 0.0
      %367 = vmatprep.subr.mxu0 0.0
      %368 = vmatpush1.xpose.msra.mxu0 0.0
      %369 = vmatprep.subr.mxu0 0.0
      %370 = vmatpush1.xpose.msra.mxu0 0.0
      %371 = vmatprep.subr.mxu0 0.0
      %372 = vmatpush1.xpose.msra.mxu0 0.0
      %373 = vmatprep.subr.mxu0 0.0
      %374 = vmatpush1.xpose.msra.mxu0 0.0
      %375 = vmatprep.subr.mxu0 0.0
      %376 = vmatpush1.xpose.msra.mxu0 0.0
      %377 = vmatprep.subr.mxu0 0.0
      %378 = vmatpush1.xpose.msra.mxu0 0.0
      %379 = vmatprep.subr.mxu0 0.0
      %380 = vmatpush1.xpose.msra.mxu0 0.0
      %381 = vmatprep.subr.mxu0 0.0
      %382 = vmatpush1.xpose.msra.mxu0 0.0
      %383 = vmatprep.subr.mxu0 0.0
      %384 = vmatpush1.xpose.msra.mxu0 0.0
      %385 = vmatprep.subr.mxu0 0.0
      %386 = vmatpush1.xpose.msra.mxu0 0.0
      %387 = vmatprep.subr.mxu0 0.0
      %388 = vmatpush1.xpose.msra.mxu0 0.0
      %389 = vmatprep.subr.mxu0 0.0
      %390 = vmatpush1.xpose.msra.mxu0 0.0
      %391 = vmatprep.subr.mxu0 0.0
      %392 = vmatpush1.xpose.msra.mxu0 0.0
      %393 = vmatprep.subr.mxu0 0.0
      %394 = vmatpush1.xpose.msra.mxu0 0.0
      %395 = vmatprep.subr.mxu0 0.0
      %396 = vmatpush1.xpose.msra.mxu0 0.0
      %397 = vmatprep.subr.mxu0 0.0
      %398 = vmatpush1.xpose.msra.mxu0 0.0
      %399 = vmatprep.subr.mxu0 0.0
      %400 = vmatpush1.xpose.msra.mxu0 0.0
      %401 = vmatprep.subr.mxu0 0.0
      %402 = vmatpush1.xpose.msra.mxu0 0.0
      %403 = vmatprep.subr.mxu0 0.0
      %404 = vmatpush1.xpose.msra.mxu0 0.0
      %405 = vmatprep.subr.mxu0 0.0
      %406 = vmatpush1.xpose.msra.mxu0 0.0
      %407 = vmatprep.subr.mxu0 0.0
      %408 = vmatpush1.xpose.msra.mxu0 0.0
      %409 = vmatprep.subr.mxu0 0.0
      %410 = vmatpush1.xpose.msra.mxu0 0.0
      %411 = vmatprep.subr.mxu0 0.0
      %412 = vmatpush1.xpose.msra.mxu0 0.0
      %413 = vmatprep.mubr.f32.mxu0 0.0
      %414 = vmatmul.mubr.f32.gmra.mrb[0].mxu0 %v344
      %v415 = vpop.f32.mrb[0].mxu0
      %v416 = vadd.f32 0.0, %v415
      %v417 = vpop.f32.mrb[0].mxu0
      %418 = vdwg.mxu0
      %v420 = vsel %vm266, %v254, 0
      %v423 = vsel %vm266, %v258, 0
      %425 = vmatprep.subr.mxu0 0.0
      %426 = vmatpush1.xpose.msra.mxu0 %v423
      %427 = vmatprep.subr.mxu0 0.0
      %428 = vmatpush1.xpose.msra.mxu0 0.0
      %429 = vmatprep.subr.mxu0 0.0
      %430 = vmatpush1.xpose.msra.mxu0 0.0
      %431 = vmatprep.subr.mxu0 0.0
      %432 = vmatpush1.xpose.msra.mxu0 0.0
      %433 = vmatprep.subr.mxu0 0.0
      %434 = vmatpush1.xpose.msra.mxu0 0.0
      %435 = vmatprep.subr.mxu0 0.0
      %436 = vmatpush1.xpose.msra.mxu0 0.0
      %437 = vmatprep.subr.mxu0 0.0
      %438 = vmatpush1.xpose.msra.mxu0 0.0
      %439 = vmatprep.subr.mxu0 0.0
      %440 = vmatpush1.xpose.msra.mxu0 0.0
      %441 = vmatprep.subr.mxu0 0.0
      %442 = vmatpush1.xpose.msra.mxu0 0.0
      %443 = vmatprep.subr.mxu0 0.0
      %444 = vmatpush1.xpose.msra.mxu0 0.0
      %445 = vmatprep.subr.mxu0 0.0
      %446 = vmatpush1.xpose.msra.mxu0 0.0
      %447 = vmatprep.subr.mxu0 0.0
      %448 = vmatpush1.xpose.msra.mxu0 0.0
      %449 = vmatprep.subr.mxu0 0.0
      %450 = vmatpush1.xpose.msra.mxu0 0.0
      %451 = vmatprep.subr.mxu0 0.0
      %452 = vmatpush1.xpose.msra.mxu0 0.0
      %453 = vmatprep.subr.mxu0 0.0
      %454 = vmatpush1.xpose.msra.mxu0 0.0
      %455 = vmatprep.subr.mxu0 0.0
      %456 = vmatpush1.xpose.msra.mxu0 0.0
      %457 = vmatprep.subr.mxu0 0.0
      %458 = vmatpush1.xpose.msra.mxu0 0.0
      %459 = vmatprep.subr.mxu0 0.0
      %460 = vmatpush1.xpose.msra.mxu0 0.0
      %461 = vmatprep.subr.mxu0 0.0
      %462 = vmatpush1.xpose.msra.mxu0 0.0
      %463 = vmatprep.subr.mxu0 0.0
      %464 = vmatpush1.xpose.msra.mxu0 0.0
      %465 = vmatprep.subr.mxu0 0.0
      %466 = vmatpush1.xpose.msra.mxu0 0.0
      %467 = vmatprep.subr.mxu0 0.0
      %468 = vmatpush1.xpose.msra.mxu0 0.0
      %469 = vmatprep.subr.mxu0 0.0
      %470 = vmatpush1.xpose.msra.mxu0 0.0
      %471 = vmatprep.subr.mxu0 0.0
      %472 = vmatpush1.xpose.msra.mxu0 0.0
      %473 = vmatprep.subr.mxu0 0.0
      %474 = vmatpush1.xpose.msra.mxu0 0.0
      %475 = vmatprep.subr.mxu0 0.0
      %476 = vmatpush1.xpose.msra.mxu0 0.0
      %477 = vmatprep.subr.mxu0 0.0
      %478 = vmatpush1.xpose.msra.mxu0 0.0
      %479 = vmatprep.subr.mxu0 0.0
      %480 = vmatpush1.xpose.msra.mxu0 0.0
      %481 = vmatprep.subr.mxu0 0.0
      %482 = vmatpush1.xpose.msra.mxu0 0.0
      %483 = vmatprep.subr.mxu0 0.0
      %484 = vmatpush1.xpose.msra.mxu0 0.0
      %485 = vmatprep.subr.mxu0 0.0
      %486 = vmatpush1.xpose.msra.mxu0 0.0
      %487 = vmatprep.subr.mxu0 0.0
      %488 = vmatpush1.xpose.msra.mxu0 0.0
      %489 = vmatprep.mubr.f32.mxu0 0.0
      %490 = vmatmul.mubr.f32.gmra.mrb[0].mxu0 %v420
      %v491 = vpop.f32.mrb[0].mxu0
      %v492 = vadd.f32 0.0, %v491
      %v493 = vpop.f32.mrb[0].mxu0
      %494 = vdwg.mxu0
      %v496 = vsel %vm266, %v255, 0
      %v499 = vsel %vm266, %v259, 0
      %501 = vmatprep.subr.mxu0 0.0
      %502 = vmatpush1.xpose.msra.mxu0 %v499
      %503 = vmatprep.subr.mxu0 0.0
      %504 = vmatpush1.xpose.msra.mxu0 0.0
      %505 = vmatprep.subr.mxu0 0.0
      %506 = vmatpush1.xpose.msra.mxu0 0.0
      %507 = vmatprep.subr.mxu0 0.0
      %508 = vmatpush1.xpose.msra.mxu0 0.0
      %509 = vmatprep.subr.mxu0 0.0
      %510 = vmatpush1.xpose.msra.mxu0 0.0
      %511 = vmatprep.subr.mxu0 0.0
      %512 = vmatpush1.xpose.msra.mxu0 0.0
      %513 = vmatprep.subr.mxu0 0.0
      %514 = vmatpush1.xpose.msra.mxu0 0.0
      %515 = vmatprep.subr.mxu0 0.0
      %516 = vmatpush1.xpose.msra.mxu0 0.0
      %517 = vmatprep.subr.mxu0 0.0
      %518 = vmatpush1.xpose.msra.mxu0 0.0
      %519 = vmatprep.subr.mxu0 0.0
      %520 = vmatpush1.xpose.msra.mxu0 0.0
      %521 = vmatprep.subr.mxu0 0.0
      %522 = vmatpush1.xpose.msra.mxu0 0.0
      %523 = vmatprep.subr.mxu0 0.0
      %524 = vmatpush1.xpose.msra.mxu0 0.0
      %525 = vmatprep.subr.mxu0 0.0
      %526 = vmatpush1.xpose.msra.mxu0 0.0
      %527 = vmatprep.subr.mxu0 0.0
      %528 = vmatpush1.xpose.msra.mxu0 0.0
      %529 = vmatprep.subr.mxu0 0.0
      %530 = vmatpush1.xpose.msra.mxu0 0.0
      %531 = vmatprep.subr.mxu0 0.0
      %532 = vmatpush1.xpose.msra.mxu0 0.0
      %533 = vmatprep.subr.mxu0 0.0
      %534 = vmatpush1.xpose.msra.mxu0 0.0
      %535 = vmatprep.subr.mxu0 0.0
      %536 = vmatpush1.xpose.msra.mxu0 0.0
      %537 = vmatprep.subr.mxu0 0.0
      %538 = vmatpush1.xpose.msra.mxu0 0.0
      %539 = vmatprep.subr.mxu0 0.0
      %540 = vmatpush1.xpose.msra.mxu0 0.0
      %541 = vmatprep.subr.mxu0 0.0
      %542 = vmatpush1.xpose.msra.mxu0 0.0
      %543 = vmatprep.subr.mxu0 0.0
      %544 = vmatpush1.xpose.msra.mxu0 0.0
      %545 = vmatprep.subr.mxu0 0.0
      %546 = vmatpush1.xpose.msra.mxu0 0.0
      %547 = vmatprep.subr.mxu0 0.0
      %548 = vmatpush1.xpose.msra.mxu0 0.0
      %549 = vmatprep.subr.mxu0 0.0
      %550 = vmatpush1.xpose.msra.mxu0 0.0
      %551 = vmatprep.subr.mxu0 0.0
      %552 = vmatpush1.xpose.msra.mxu0 0.0
      %553 = vmatprep.subr.mxu0 0.0
      %554 = vmatpush1.xpose.msra.mxu0 0.0
      %555 = vmatprep.subr.mxu0 0.0
      %556 = vmatpush1.xpose.msra.mxu0 0.0
      %557 = vmatprep.subr.mxu0 0.0
      %558 = vmatpush1.xpose.msra.mxu0 0.0
      %559 = vmatprep.subr.mxu0 0.0
      %560 = vmatpush1.xpose.msra.mxu0 0.0
      %561 = vmatprep.subr.mxu0 0.0
      %562 = vmatpush1.xpose.msra.mxu0 0.0
      %563 = vmatprep.subr.mxu0 0.0
      %564 = vmatpush1.xpose.msra.mxu0 0.0
      %565 = vmatprep.mubr.f32.mxu0 0.0
      %566 = vmatmul.mubr.f32.gmra.mrb[0].mxu0 %v496
      %v567 = vpop.f32.mrb[0].mxu0
      %v568 = vadd.f32 0.0, %v567
      %v569 = vpop.f32.mrb[0].mxu0
      %570 = vdwg.mxu0
      %v571 = vrcp.pop 2.828427
      %v572 = vmul.f32 %v340, %v571
      %v573 = vmul.f32 %v416, %v571
      %v574 = vmul.f32 %v492, %v571
      %v575 = vmul.f32 %v568, %v571
      %v576 = vsel %vm265, 1, 0
      %v577 = vlaneseq
      %v578 = vshrl.u32 %v577, 7
      %v579 = vsub.s32 0, %v578
      %v580 = vrot.slane %v576, %v579
      %vm581 = vcmp.eq.s32.totalorder %v580, 1
      %v582 = vsel %vm581, -1e+10, %v572
      %v583 = vsel %vm581, -1e+10, %v573
      %v584 = vsel %vm581, -1e+10, %v574
      %v585 = vsel %vm581, -1e+10, %v575
      %v586 = vsel %vm266, %v582, -inf
      %587 = vmax.xlane.f32.xlu0 %v586
      %v588 = vpop.xlane.xlu0 %587
      %v589 = vsel %vm266, %v583, -inf
      %590 = vmax.xlane.f32.xlu0 %v589
      %v591 = vpop.xlane.xlu0 %590
      %v592 = vsel %vm266, %v584, -inf
      %593 = vmax.xlane.f32.xlu0 %v592
      %v594 = vpop.xlane.xlu0 %593
      %v595 = vsel %vm266, %v585, -inf
      %596 = vmax.xlane.f32.xlu0 %v595
      %v597 = vpop.xlane.xlu0 %596
      %v598 = vsub.f32 %v582, %v588
      %v599 = vsub.f32 %v583, %v591
      %v600 = vsub.f32 %v584, %v594
      %v601 = vsub.f32 %v585, %v597
      %v602 = vmul.f32 %v598, 1.442695
      %v603 = vpow.pop %v602
      %v604 = vmul.f32 %v599, 1.442695
      %v605 = vpow.pop %v604
      %v606 = vmul.f32 %v600, 1.442695
      %v607 = vpow.pop %v606
      %v608 = vmul.f32 %v601, 1.442695
      %v609 = vpow.pop %v608
      %v610 = vsel %vm266, %v603, 0.0
      %611 = vadd.xlane.f32.xlu0 %v610
      %v612 = vpop.xlane.xlu0 %611
      %v613 = vsel %vm266, %v605, 0.0
      %614 = vadd.xlane.f32.xlu0 %v613
      %v615 = vpop.xlane.xlu0 %614
      %v616 = vsel %vm266, %v607, 0.0
      %617 = vadd.xlane.f32.xlu0 %v616
      %v618 = vpop.xlane.xlu0 %617
      %v619 = vsel %vm266, %v609, 0.0
      %620 = vadd.xlane.f32.xlu0 %v619
      %v621 = vpop.xlane.xlu0 %620
      %v622 = vrcp.pop %v612
      %v623 = vmul.f32 %v603, %v622
      %v624 = vrcp.pop %v615
      %v625 = vmul.f32 %v605, %v624
      %v626 = vrcp.pop %v618
      %v627 = vmul.f32 %v607, %v626
      %v628 = vrcp.pop %v621
      %v629 = vmul.f32 %v609, %v628
      %v631 = vsel %vm266, %v623, 0
      %633 = vmatprep.subr.mxu0 0.0
      %634 = vmatpush1.msra.mxu0 %v260
      %635 = vmatprep.subr.mxu0 0.0
      %636 = vmatpush1.msra.mxu0 0.0
      %637 = vmatprep.subr.mxu0 0.0
      %638 = vmatpush1.msra.mxu0 0.0
      %639 = vmatprep.subr.mxu0 0.0
      %640 = vmatpush1.msra.mxu0 0.0
      %641 = vmatprep.subr.mxu0 0.0
      %642 = vmatpush1.msra.mxu0 0.0
      %643 = vmatprep.subr.mxu0 0.0
      %644 = vmatpush1.msra.mxu0 0.0
      %645 = vmatprep.subr.mxu0 0.0
      %646 = vmatpush1.msra.mxu0 0.0
      %647 = vmatprep.subr.mxu0 0.0
      %648 = vmatpush1.msra.mxu0 0.0
      %649 = vmatprep.subr.mxu0 0.0
      %650 = vmatpush1.msra.mxu0 0.0
      %651 = vmatprep.subr.mxu0 0.0
      %652 = vmatpush1.msra.mxu0 0.0
      %653 = vmatprep.subr.mxu0 0.0
      %654 = vmatpush1.msra.mxu0 0.0
      %655 = vmatprep.subr.mxu0 0.0
      %656 = vmatpush1.msra.mxu0 0.0
      %657 = vmatprep.subr.mxu0 0.0
      %658 = vmatpush1.msra.mxu0 0.0
      %659 = vmatprep.subr.mxu0 0.0
      %660 = vmatpush1.msra.mxu0 0.0
      %661 = vmatprep.subr.mxu0 0.0
      %662 = vmatpush1.msra.mxu0 0.0
      %663 = vmatprep.subr.mxu0 0.0
      %664 = vmatpush1.msra.mxu0 0.0
      %665 = vmatprep.subr.mxu0 0.0
      %666 = vmatpush1.msra.mxu0 0.0
      %667 = vmatprep.subr.mxu0 0.0
      %668 = vmatpush1.msra.mxu0 0.0
      %669 = vmatprep.subr.mxu0 0.0
      %670 = vmatpush1.msra.mxu0 0.0
      %671 = vmatprep.subr.mxu0 0.0
      %672 = vmatpush1.msra.mxu0 0.0
      %673 = vmatprep.subr.mxu0 0.0
      %674 = vmatpush1.msra.mxu0 0.0
      %675 = vmatprep.subr.mxu0 0.0
      %676 = vmatpush1.msra.mxu0 0.0
      %677 = vmatprep.subr.mxu0 0.0
      %678 = vmatpush1.msra.mxu0 0.0
      %679 = vmatprep.subr.mxu0 0.0
      %680 = vmatpush1.msra.mxu0 0.0
      %681 = vmatprep.subr.mxu0 0.0
      %682 = vmatpush1.msra.mxu0 0.0
      %683 = vmatprep.subr.mxu0 0.0
      %684 = vmatpush1.msra.mxu0 0.0
      %685 = vmatprep.subr.mxu0 0.0
      %686 = vmatpush1.msra.mxu0 0.0
      %687 = vmatprep.subr.mxu0 0.0
      %688 = vmatpush1.msra.mxu0 0.0
      %689 = vmatprep.subr.mxu0 0.0
      %690 = vmatpush1.msra.mxu0 0.0
      %691 = vmatprep.subr.mxu0 0.0
      %692 = vmatpush1.msra.mxu0 0.0
      %693 = vmatprep.subr.mxu0 0.0
      %694 = vmatpush1.msra.mxu0 0.0
      %695 = vmatprep.subr.mxu0 0.0
      %696 = vmatpush1.msra.mxu0 0.0
      %697 = vmatprep.mubr.f32.mxu0 0.0
      %698 = vmatmul.mubr.f32.gmra.mrb[0].mxu0 %v631
      %v699 = vpop.f32.mrb[0].mxu0
      %v700 = vadd.f32 0.0, %v699
      %v701 = vpop.f32.mrb[0].mxu0
      %702 = vdwg.mxu0
      %v704 = vsel %vm266, %v625, 0
      %706 = vmatprep.subr.mxu0 0.0
      %707 = vmatpush1.msra.mxu0 %v261
      %708 = vmatprep.subr.mxu0 0.0
      %709 = vmatpush1.msra.mxu0 0.0
      %710 = vmatprep.subr.mxu0 0.0
      %711 = vmatpush1.msra.mxu0 0.0
      %712 = vmatprep.subr.mxu0 0.0
      %713 = vmatpush1.msra.mxu0 0.0
      %714 = vmatprep.subr.mxu0 0.0
      %715 = vmatpush1.msra.mxu0 0.0
      %716 = vmatprep.subr.mxu0 0.0
      %717 = vmatpush1.msra.mxu0 0.0
      %718 = vmatprep.subr.mxu0 0.0
      %719 = vmatpush1.msra.mxu0 0.0
      %720 = vmatprep.subr.mxu0 0.0
      %721 = vmatpush1.msra.mxu0 0.0
      %722 = vmatprep.subr.mxu0 0.0
      %723 = vmatpush1.msra.mxu0 0.0
      %724 = vmatprep.subr.mxu0 0.0
      %725 = vmatpush1.msra.mxu0 0.0
      %726 = vmatprep.subr.mxu0 0.0
      %727 = vmatpush1.msra.mxu0 0.0
      %728 = vmatprep.subr.mxu0 0.0
      %729 = vmatpush1.msra.mxu0 0.0
      %730 = vmatprep.subr.mxu0 0.0
      %731 = vmatpush1.msra.mxu0 0.0
      %732 = vmatprep.subr.mxu0 0.0
      %733 = vmatpush1.msra.mxu0 0.0
      %734 = vmatprep.subr.mxu0 0.0
      %735 = vmatpush1.msra.mxu0 0.0
      %736 = vmatprep.subr.mxu0 0.0
      %737 = vmatpush1.msra.mxu0 0.0
      %738 = vmatprep.subr.mxu0 0.0
      %739 = vmatpush1.msra.mxu0 0.0
      %740 = vmatprep.subr.mxu0 0.0
      %741 = vmatpush1.msra.mxu0 0.0
      %742 = vmatprep.subr.mxu0 0.0
      %743 = vmatpush1.msra.mxu0 0.0
      %744 = vmatprep.subr.mxu0 0.0
      %745 = vmatpush1.msra.mxu0 0.0
      %746 = vmatprep.subr.mxu0 0.0
      %747 = vmatpush1.msra.mxu0 0.0
      %748 = vmatprep.subr.mxu0 0.0
      %749 = vmatpush1.msra.mxu0 0.0
      %750 = vmatprep.subr.mxu0 0.0
      %751 = vmatpush1.msra.mxu0 0.0
      %752 = vmatprep.subr.mxu0 0.0
      %753 = vmatpush1.msra.mxu0 0.0
      %754 = vmatprep.subr.mxu0 0.0
      %755 = vmatpush1.msra.mxu0 0.0
      %756 = vmatprep.subr.mxu0 0.0
      %757 = vmatpush1.msra.mxu0 0.0
      %758 = vmatprep.subr.mxu0 0.0
      %759 = vmatpush1.msra.mxu0 0.0
      %760 = vmatprep.subr.mxu0 0.0
      %761 = vmatpush1.msra.mxu0 0.0
      %762 = vmatprep.subr.mxu0 0.0
      %763 = vmatpush1.msra.mxu0 0.0
      %764 = vmatprep.subr.mxu0 0.0
      %765 = vmatpush1.msra.mxu0 0.0
      %766 = vmatprep.subr.mxu0 0.0
      %767 = vmatpush1.msra.mxu0 0.0
      %768 = vmatprep.subr.mxu0 0.0
      %769 = vmatpush1.msra.mxu0 0.0
      %770 = vmatprep.mubr.f32.mxu0 0.0
      %771 = vmatmul.mubr.f32.gmra.mrb[0].mxu0 %v704
      %v772 = vpop.f32.mrb[0].mxu0
      %v773 = vadd.f32 0.0, %v772
      %v774 = vpop.f32.mrb[0].mxu0
      %775 = vdwg.mxu0
      %v777 = vsel %vm266, %v627, 0
      %779 = vmatprep.subr.mxu0 0.0
      %780 = vmatpush1.msra.mxu0 %v262
      %781 = vmatprep.subr.mxu0 0.0
      %782 = vmatpush1.msra.mxu0 0.0
      %783 = vmatprep.subr.mxu0 0.0
      %784 = vmatpush1.msra.mxu0 0.0
      %785 = vmatprep.subr.mxu0 0.0
      %786 = vmatpush1.msra.mxu0 0.0
      %787 = vmatprep.subr.mxu0 0.0
      %788 = vmatpush1.msra.mxu0 0.0
      %789 = vmatprep.subr.mxu0 0.0
      %790 = vmatpush1.msra.mxu0 0.0
      %791 = vmatprep.subr.mxu0 0.0
      %792 = vmatpush1.msra.mxu0 0.0
      %793 = vmatprep.subr.mxu0 0.0
      %794 = vmatpush1.msra.mxu0 0.0
      %795 = vmatprep.subr.mxu0 0.0
      %796 = vmatpush1.msra.mxu0 0.0
      %797 = vmatprep.subr.mxu0 0.0
      %798 = vmatpush1.msra.mxu0 0.0
      %799 = vmatprep.subr.mxu0 0.0
      %800 = vmatpush1.msra.mxu0 0.0
      %801 = vmatprep.subr.mxu0 0.0
      %802 = vmatpush1.msra.mxu0 0.0
      %803 = vmatprep.subr.mxu0 0.0
      %804 = vmatpush1.msra.mxu0 0.0
      %805 = vmatprep.subr.mxu0 0.0
      %806 = vmatpush1.msra.mxu0 0.0
      %807 = vmatprep.subr.mxu0 0.0
      %808 = vmatpush1.msra.mxu0 0.0
      %809 = vmatprep.subr.mxu0 0.0
      %810 = vmatpush1.msra.mxu0 0.0
      %811 = vmatprep.subr.mxu0 0.0
      %812 = vmatpush1.msra.mxu0 0.0
      %813 = vmatprep.subr.mxu0 0.0
      %814 = vmatpush1.msra.mxu0 0.0
      %815 = vmatprep.subr.mxu0 0.0
      %816 = vmatpush1.msra.mxu0 0.0
      %817 = vmatprep.subr.mxu0 0.0
      %818 = vmatpush1.msra.mxu0 0.0
      %819 = vmatprep.subr.mxu0 0.0
      %820 = vmatpush1.msra.mxu0 0.0
      %821 = vmatprep.subr.mxu0 0.0
      %822 = vmatpush1.msra.mxu0 0.0
      %823 = vmatprep.subr.mxu0 0.0
      %824 = vmatpush1.msra.mxu0 0.0
      %825 = vmatprep.subr.mxu0 0.0
      %826 = vmatpush1.msra.mxu0 0.0
      %827 = vmatprep.subr.mxu0 0.0
      %828 = vmatpush1.msra.mxu0 0.0
      %829 = vmatprep.subr.mxu0 0.0
      %830 = vmatpush1.msra.mxu0 0.0
      %831 = vmatprep.subr.mxu0 0.0
      %832 = vmatpush1.msra.mxu0 0.0
      %833 = vmatprep.subr.mxu0 0.0
      %834 = vmatpush1.msra.mxu0 0.0
      %835 = vmatprep.subr.mxu0 0.0
      %836 = vmatpush1.msra.mxu0 0.0
      %837 = vmatprep.subr.mxu0 0.0
      %838 = vmatpush1.msra.mxu0 0.0
      %839 = vmatprep.subr.mxu0 0.0
      %840 = vmatpush1.msra.mxu0 0.0
      %841 = vmatprep.subr.mxu0 0.0
      %842 = vmatpush1.msra.mxu0 0.0
      %843 = vmatprep.mubr.f32.mxu0 0.0
      %844 = vmatmul.mubr.f32.gmra.mrb[0].mxu0 %v777
      %v845 = vpop.f32.mrb[0].mxu0
      %v846 = vadd.f32 0.0, %v845
      %v847 = vpop.f32.mrb[0].mxu0
      %848 = vdwg.mxu0
      %v850 = vsel %vm266, %v629, 0
      %852 = vmatprep.subr.mxu0 0.0
      %853 = vmatpush1.msra.mxu0 %v263
      %854 = vmatprep.subr.mxu0 0.0
      %855 = vmatpush1.msra.mxu0 0.0
      %856 = vmatprep.subr.mxu0 0.0
      %857 = vmatpush1.msra.mxu0 0.0
      %858 = vmatprep.subr.mxu0 0.0
      %859 = vmatpush1.msra.mxu0 0.0
      %860 = vmatprep.subr.mxu0 0.0
      %861 = vmatpush1.msra.mxu0 0.0
      %862 = vmatprep.subr.mxu0 0.0
      %863 = vmatpush1.msra.mxu0 0.0
      %864 = vmatprep.subr.mxu0 0.0
      %865 = vmatpush1.msra.mxu0 0.0
      %866 = vmatprep.subr.mxu0 0.0
      %867 = vmatpush1.msra.mxu0 0.0
      %868 = vmatprep.subr.mxu0 0.0
      %869 = vmatpush1.msra.mxu0 0.0
      %870 = vmatprep.subr.mxu0 0.0
      %871 = vmatpush1.msra.mxu0 0.0
      %872 = vmatprep.subr.mxu0 0.0
      %873 = vmatpush1.msra.mxu0 0.0
      %874 = vmatprep.subr.mxu0 0.0
      %875 = vmatpush1.msra.mxu0 0.0
      %876 = vmatprep.subr.mxu0 0.0
      %877 = vmatpush1.msra.mxu0 0.0
      %878 = vmatprep.subr.mxu0 0.0
      %879 = vmatpush1.msra.mxu0 0.0
      %880 = vmatprep.subr.mxu0 0.0
      %881 = vmatpush1.msra.mxu0 0.0
      %882 = vmatprep.subr.mxu0 0.0
      %883 = vmatpush1.msra.mxu0 0.0
      %884 = vmatprep.subr.mxu0 0.0
      %885 = vmatpush1.msra.mxu0 0.0
      %886 = vmatprep.subr.mxu0 0.0
      %887 = vmatpush1.msra.mxu0 0.0
      %888 = vmatprep.subr.mxu0 0.0
      %889 = vmatpush1.msra.mxu0 0.0
      %890 = vmatprep.subr.mxu0 0.0
      %891 = vmatpush1.msra.mxu0 0.0
      %892 = vmatprep.subr.mxu0 0.0
      %893 = vmatpush1.msra.mxu0 0.0
      %894 = vmatprep.subr.mxu0 0.0
      %895 = vmatpush1.msra.mxu0 0.0
      %896 = vmatprep.subr.mxu0 0.0
      %897 = vmatpush1.msra.mxu0 0.0
      %898 = vmatprep.subr.mxu0 0.0
      %899 = vmatpush1.msra.mxu0 0.0
      %900 = vmatprep.subr.mxu0 0.0
      %901 = vmatpush1.msra.mxu0 0.0
      %902 = vmatprep.subr.mxu0 0.0
      %903 = vmatpush1.msra.mxu0 0.0
      %904 = vmatprep.subr.mxu0 0.0
      %905 = vmatpush1.msra.mxu0 0.0
      %906 = vmatprep.subr.mxu0 0.0
      %907 = vmatpush1.msra.mxu0 0.0
      %908 = vmatprep.subr.mxu0 0.0
      %909 = vmatpush1.msra.mxu0 0.0
      %910 = vmatprep.subr.mxu0 0.0
      %911 = vmatpush1.msra.mxu0 0.0
      %912 = vmatprep.subr.mxu0 0.0
      %913 = vmatpush1.msra.mxu0 0.0
      %914 = vmatprep.subr.mxu0 0.0
      %915 = vmatpush1.msra.mxu0 0.0
      %916 = vmatprep.mubr.f32.mxu0 0.0
      %917 = vmatmul.mubr.f32.gmra.mrb[0].mxu0 %v850
      %v918 = vpop.f32.mrb[0].mxu0
      %v919 = vadd.f32 0.0, %v918
      %v920 = vpop.f32.mrb[0].mxu0
      %921 = vdwg.mxu0
      %922 = vst.msk [vmem:[%s251] sm:$0xff] %vm266, %v700
      %923 = vst.msk [vmem:[%s251 + $0x8] sm:$0xff] %vm266, %v773
      %924 = vst.msk [vmem:[%s251 + $0x10] sm:$0xff] %vm266, %v846
      %925 = vst.msk [vmem:[%s251 + $0x18] sm:$0xff] %vm266, %v919
      %p926 = scmp.lt.s32.totalorder %s15, 1
      %s927 = scalar_select %p926, %s15, 1
      %s928 = smul.addr %s927, 4
      %s929 = smul.addr %s928, 8
      %s930 = scalar_lea.vmem %s4, %s929
      // Predicated region
      $region37: #{encoder_forward.23} parent=35 // pred_check
        %p931 = pneg %p137
      $region38: #{encoder_forward.23} parent=35 // pred_check_branch
        %933 = sbr.rel (%p931) target = $region40
      $region39: #{encoder_forward.23} parent=35 // pred_region
        _
      $region40: #{encoder_forward.23} parent=35 // pred_fallthru
        _
    $region36: #{encoder_forward.23} parent=5 // pred_fallthru
      _
    %p934 = scmp.le.s32.totalorder 2, %s10
    // Predicated region
    $region41: #{encoder_forward.23} parent=5 // pred_check
      %p935 = pneg %p934
    $region42: #{encoder_forward.23} parent=5 // pred_check_branch
      %937 = sbr.rel (%p935) target = $region44
    $region43: #{encoder_forward.23} parent=5 // pred_region
      %s938 = ssub.s32 %s10, 2
      // Predicated region
      $region45: #{encoder_forward.23} parent=43 // pred_check
        %p939 = pneg %p143
      $region46: #{encoder_forward.23} parent=43 // pred_check_branch
        %941 = sbr.rel (%p939) target = $region48
      $region47: #{encoder_forward.23} parent=43 // pred_region
        %p942 = scmp.lt.s32.totalorder %s16, 1
        %s943 = scalar_select %p942, %s16, 1
        %s944 = smul.addr %s943, 4
        %s945 = smul.addr %s944, 8
        %s946 = scalar_lea.vmem %s4, %s945
      $region48: #{encoder_forward.23} parent=43 // pred_fallthru
        _
    $region44: #{encoder_forward.23} parent=5 // pred_fallthru
      _
  $region6: #{encoder_forward.23} parent=0 // loop_footer
    %s14 = sadd.s32 1, %s10
  $region7: #{encoder_forward.23} parent=0 // loop_footer_branch
    %9 = sbr.rel target = $region3
  $region8: #{encoder_forward.23} parent=0 // loop_exit
    _

// kernel: encoder_forward.37
$region0: #{encoder_forward.37}
  #allocation0 [shape = 'u32[]', space=smem, size = 0x4, offset = 0x4, fixed_abs, tag = 'smem constant byte address 0x4 - core index']
  #allocation1 [shape = 'u32[144,128]{1,0:T(1,128)}', space=vmem, size = 0x12000, scoped, tag = 'internal scratch']
  %s0 = inlined_call_operand.vmem [shape: f32[16,32], index: 0, kind: input, shape index: {}]
  %s1 = inlined_call_operand.vmem [shape: f32[16,32], index: 1, kind: input, shape index: {}]
  %s2 = inlined_call_operand.vmem [shape: f32[1,32], index: 2, kind: input, shape index: {}]
  %s3 = inlined_call_operand.vmem [shape: f32[1,32], index: 3, kind: input, shape index: {}]
  %s4 = inlined_call_operand.hbm [shape: f32[16,32], index: 4, kind: output, shape index: {}]
  %s5 = sld [smem:[#allocation0]]
  $region26: #{encoder_forward.37} parent=0
    _
  %s7 = ssub.s32 1, %s5
  %s8 = scalar_select 0, %s7, %s5
  $region1: #{encoder_forward.37} parent=0
    #allocation2 [shape = 'u8[8192]{0}', space=vmem, size = 0x2000, scoped, tag = 'output window, operand 0, single buffered']
    #allocation3 [shape = 's32[1]{0}', space=sflag, size = 0x4, scoped, tag = 'scoped memory for encoder_forward.37']
    %9 = vsyncpa [#allocation3], 0
    // Predicated region
    $region2: #{encoder_forward.37} parent=1 // pred_check
      _
    $region3: #{encoder_forward.37} parent=1 // pred_check_branch
      %11 = sbr.rel (0) target = $region5
    $region4: #{encoder_forward.37} parent=1 // pred_region
      _
    $region5: #{encoder_forward.37} parent=1 // pred_fallthru
      _
    // Predicated region
    $region6: #{encoder_forward.37} parent=1 // pred_check
      _
    $region7: #{encoder_forward.37} parent=1 // pred_check_branch
      %13 = sbr.rel (0) target = $region9
    $region8: #{encoder_forward.37} parent=1 // pred_region
      _
    $region9: #{encoder_forward.37} parent=1 // pred_fallthru
      _
    // Predicated region
    $region10: #{encoder_forward.37} parent=1 // pred_check
      _
    $region11: #{encoder_forward.37} parent=1 // pred_check_branch
      %15 = sbr.rel (0) target = $region13
    $region12: #{encoder_forward.37} parent=1 // pred_region
      _
    $region13: #{encoder_forward.37} parent=1 // pred_fallthru
      _
    // Predicated region
    $region14: #{encoder_forward.37} parent=1 // pred_check
      _
    $region15: #{encoder_forward.37} parent=1 // pred_check_branch
      %17 = sbr.rel (0) target = $region17
    $region16: #{encoder_forward.37} parent=1 // pred_region
      _
    $region17: #{encoder_forward.37} parent=1 // pred_fallthru
      _
    %v18 = vld [vmem:[%s0] sm:$0xff]
    %v19 = vld [vmem:[%s0 + $0x8] sm:$0xff]
    %v20 = vld [vmem:[%s1] sm:$0xff]
    %v21 = vld [vmem:[%s1 + $0x8] sm:$0xff]
    %v22 = vadd.f32 %v18, %v20
    %v23 = vadd.f32 %v19, %v21
    %vm24 = vcmask 261120
    %v25 = vsel %vm24, %v22, 0.0
    %26 = vadd.xlane.f32.xlu0 %v25
    %v27 = vpop.xlane.xlu0 %26
    %v28 = vsel %vm24, %v23, 0.0
    %29 = vadd.xlane.f32.xlu0 %v28
    %v30 = vpop.xlane.xlu0 %29
    %v31 = vrcp.pop 32.0
    %v32 = vmul.f32 %v27, %v31
    %v33 = vmul.f32 %v30, %v31
    %v34 = vsub.f32 %v22, %v32
    %v35 = vsub.f32 %v23, %v33
    %v36 = vmul.f32 %v34, %v34
    %v37 = vmul.f32 %v35, %v35
    %v38 = vsel %vm24, %v36, 0.0
    %39 = vadd.xlane.f32.xlu0 %v38
    %v40 = vpop.xlane.xlu0 %39
    %v41 = vsel %vm24, %v37, 0.0
    %42 = vadd.xlane.f32.xlu0 %v41
    %v43 = vpop.xlane.xlu0 %42
    %v44 = vmul.f32 %v40, %v31
    %v45 = vmul.f32 %v43, %v31
    %v46 = vadd.f32 %v44, 1e-05
    %v47 = vadd.f32 %v45, 1e-05
    %v48 = vrsqrt.pop %v46
    %v49 = vrsqrt.pop %v47
    %v50 = vmul.f32 %v34, %v48
    %v51 = vmul.f32 %v35, %v49
    %v52 = vld [vmem:[%s2] sm:$0x1]
    %v54 = vlaneseq
    %v55 = vshrl.u32 %v54, 7
    %v56 = vsub.s32 0, %v55
    %v57 = vrot.slane %v52, %v56
    %v59 = vmul.f32 %v50, %v57
    %v60 = vmul.f32 %v51, %v57
    %v61 = vld [vmem:[%s3] sm:$0x1]
    %v63 = vlaneseq
    %v64 = vshrl.u32 %v63, 7
    %v65 = vsub.s32 0, %v64
    %v66 = vrot.slane %v61, %v65
    %v68 = vadd.f32 %v59, %v66
    %v69 = vadd.f32 %v60, %v66
    %70 = vst.msk [vmem:[#allocation2] sm:$0xff] %vm24, %v68
    %71 = vst.msk [vmem:[#allocation2 + $0x8] sm:$0xff] %vm24, %v69
    // Predicated region
    $region18: #{encoder_forward.37} parent=1 // pred_check
      _
    $region19: #{encoder_forward.37} parent=1 // pred_check_branch
      %73 = sbr.rel (0) target = $region21
    $region20: #{encoder_forward.37} parent=1 // pred_region
      %s75 = ssub.s32 256, 256
      %76 = vsyncadd [#allocation3], %s75
      %s77 = sshll.u32 [#allocation2], 4
      %s78 = int_to_ptr.vmem [resolvable:$true] %s77
      %83 = dma.vmem_to_hbm [thread:$0]  %s78, 256, %s4, [#allocation3], 128, 128, 8
    $region21: #{encoder_forward.37} parent=1 // pred_fallthru
      _
    // Predicated region
    $region22: #{encoder_forward.37} parent=1 // pred_check
      _
    $region23: #{encoder_forward.37} parent=1 // pred_check_branch
      %85 = sbr.rel (0) target = $region25
    $region24: #{encoder_forward.37} parent=1 // pred_region
      %86 = dma.done [#allocation3], 256
    $region25: #{encoder_forward.37} parent=1 // pred_fallthru
      _
    %87 = vsyncpa [#allocation3], 1

// kernel: encoder_forward.26
$region0: #{encoder_forward.26}
  #allocation0 [shape = 'u32[]', space=smem, size = 0x4, offset = 0x4, fixed_abs, tag = 'smem constant byte address 0x4 - core index']
  #allocation1 [shape = 'u32[144,128]{1,0:T(1,128)}', space=vmem, size = 0x12000, scoped, tag = 'internal scratch']
  %s0 = inlined_call_operand.vmem [shape: f32[16,32], index: 0, kind: input, shape index: {}]
  %s1 = inlined_call_operand.vmem [shape: f32[32,64], index: 1, kind: input, shape index: {}]
  %s2 = inlined_call_operand.vmem [shape: f32[1,64], index: 2, kind: input, shape index: {}]
  %s3 = inlined_call_operand.vmem [shape: f32[16,64], index: 3, kind: output, shape index: {}]
  %s4 = sld [smem:[#allocation0]]
  $region22: #{encoder_forward.26} parent=0
    _
  %s6 = ssub.s32 1, %s4
  %s7 = scalar_select 0, %s6, %s4
  // Predicated region
  $region2: #{encoder_forward.26} parent=0 // pred_check
    _
  $region3: #{encoder_forward.26} parent=0 // pred_check_branch
    %9 = sbr.rel (0) target = $region5
  $region4: #{encoder_forward.26} parent=0 // pred_region
    _
  $region5: #{encoder_forward.26} parent=0 // pred_fallthru
    _
  // Predicated region
  $region6: #{encoder_forward.26} parent=0 // pred_check
    _
  $region7: #{encoder_forward.26} parent=0 // pred_check_branch
    %11 = sbr.rel (0) target = $region9
  $region8: #{encoder_forward.26} parent=0 // pred_region
    _
  $region9: #{encoder_forward.26} parent=0 // pred_fallthru
    _
  // Predicated region
  $region10: #{encoder_forward.26} parent=0 // pred_check
    _
  $region11: #{encoder_forward.26} parent=0 // pred_check_branch
    %13 = sbr.rel (0) target = $region13
  $region12: #{encoder_forward.26} parent=0 // pred_region
    _
  $region13: #{encoder_forward.26} parent=0 // pred_fallthru
    _
  %v14 = vld [vmem:[%s0] sm:$0xff]
  %v15 = vld [vmem:[%s0 + $0x8] sm:$0xff]
  %v16 = vld [vmem:[%s1] sm:$0xff]
  %v17 = vld [vmem:[%s1 + $0x8] sm:$0xff]
  %v18 = vld [vmem:[%s1 + $0x10] sm:$0xff]
  %v19 = vld [vmem:[%s1 + $0x18] sm:$0xff]
  %v20 = vld [vmem:[%s2] sm:$0x1]
  %v22 = vlaneseq
  %v23 = vshrl.u32 %v22, 7
  %v24 = vsub.s32 0, %v23
  %v25 = vrot.slane %v20, %v24
  %vm27 = vcmask 261120
  %v29 = vsel %vm27, %v14, 0
  %v32 = vsel %vm27, %v15, 0
  %34 = vmatprep.subr.mxu0 0.0
  %35 = vmatpush1.msra.mxu0 %v16
  %36 = vmatprep.subr.mxu0 0.0
  %37 = vmatpush1.msra.mxu0 %v17
  %38 = vmatprep.subr.mxu0 0.0
  %39 = vmatpush1.msra.mxu0 %v18
  %40 = vmatprep.subr.mxu0 0.0
  %41 = vmatpush1.msra.mxu0 %v19
  %42 = vmatprep.subr.mxu0 0.0
  %43 = vmatpush1.msra.mxu0 0.0
  %44 = vmatprep.subr.mxu0 0.0
  %45 = vmatpush1.msra.mxu0 0.0
  %46 = vmatprep.subr.mxu0 0.0
  %47 = vmatpush1.msra.mxu0 0.0
  %48 = vmatprep.subr.mxu0 0.0
  %49 = vmatpush1.msra.mxu0 0.0
  %50 = vmatprep.subr.mxu0 0.0
  %51 = vmatpush1.msra.mxu0 0.0
  %52 = vmatprep.subr.mxu0 0.0
  %53 = vmatpush1.msra.mxu0 0.0
  %54 = vmatprep.subr.mxu0 0.0
  %55 = vmatpush1.msra.mxu0 0.0
  %56 = vmatprep.subr.mxu0 0.0
  %57 = vmatpush1.msra.mxu0 0.0
  %58 = vmatprep.subr.mxu0 0.0
  %59 = vmatpush1.msra.mxu0 0.0
  %60 = vmatprep.subr.mxu0 0.0
  %61 = vmatpush1.msra.mxu0 0.0
  %62 = vmatprep.subr.mxu0 0.0
  %63 = vmatpush1.msra.mxu0 0.0
  %64 = vmatprep.subr.mxu0 0.0
  %65 = vmatpush1.msra.mxu0 0.0
  %66 = vmatprep.subr.mxu0 0.0
  %67 = vmatpush1.msra.mxu0 0.0
  %68 = vmatprep.subr.mxu0 0.0
  %69 = vmatpush1.msra.mxu0 0.0
  %70 = vmatprep.subr.mxu0 0.0
  %71 = vmatpush1.msra.mxu0 0.0
  %72 = vmatprep.subr.mxu0 0.0
  %73 = vmatpush1.msra.mxu0 0.0
  %74 = vmatprep.subr.mxu0 0.0
  %75 = vmatpush1.msra.mxu0 0.0
  %76 = vmatprep.subr.mxu0 0.0
  %77 = vmatpush1.msra.mxu0 0.0
  %78 = vmatprep.subr.mxu0 0.0
  %79 = vmatpush1.msra.mxu0 0.0
  %80 = vmatprep.subr.mxu0 0.0
  %81 = vmatpush1.msra.mxu0 0.0
  %82 = vmatprep.subr.mxu0 0.0
  %83 = vmatpush1.msra.mxu0 0.0
  %84 = vmatprep.subr.mxu0 0.0
  %85 = vmatpush1.msra.mxu0 0.0
  %86 = vmatprep.subr.mxu0 0.0
  %87 = vmatpush1.msra.mxu0 0.0
  %88 = vmatprep.subr.mxu0 0.0
  %89 = vmatpush1.msra.mxu0 0.0
  %90 = vmatprep.subr.mxu0 0.0
  %91 = vmatpush1.msra.mxu0 0.0
  %92 = vmatprep.subr.mxu0 0.0
  %93 = vmatpush1.msra.mxu0 0.0
  %94 = vmatprep.subr.mxu0 0.0
  %95 = vmatpush1.msra.mxu0 0.0
  %96 = vmatprep.subr.mxu0 0.0
  %97 = vmatpush1.msra.mxu0 0.0
  %98 = vmatprep.mubr.f32.mxu0 0.0
  %99 = vmatmul.mubr.f32.gmra.mrb[0].mxu0 %v29
  %v100 = vpop.f32.mrb[0].mxu0
  %v101 = vadd.f32 %v25, %v100
  %v102 = vpop.f32.mrb[0].mxu0
  %103 = vmatprep.mubr.f32.mxu0 0.0
  %104 = vmatmul.mubr.f32.gmra.mrb[0].mxu0 %v32
  %v105 = vpop.f32.mrb[0].mxu0
  %v106 = vadd.f32 %v25, %v105
  %v107 = vpop.f32.mrb[0].mxu0
  %108 = vdwg.mxu0
  %v109 = vmax.f32 %v101, 0.0
  %v110 = vmax.f32 %v106, 0.0
  %vm111 = vcmask 523264
  %112 = vst.msk [vmem:[%s3] sm:$0xff] %vm111, %v109
  %113 = vst.msk [vmem:[%s3 + $0x8] sm:$0xff] %vm111, %v110
  // Predicated region
  $region14: #{encoder_forward.26} parent=0 // pred_check
    _
  $region15: #{encoder_forward.26} parent=0 // pred_check_branch
    %115 = sbr.rel (0) target = $region17
  $region16: #{encoder_forward.26} parent=0 // pred_region
    _
  $region17: #{encoder_forward.26} parent=0 // pred_fallthru
    _
  // Predicated region
  $region18: #{encoder_forward.26} parent=0 // pred_check
    _
  $region19: #{encoder_forward.26} parent=0 // pred_check_branch
    %117 = sbr.rel (0) target = $region21
  $region20: #{encoder_forward.26} parent=0 // pred_region
    _
  $region21: #{encoder_forward.26} parent=0 // pred_fallthru
    _

</llo_original>
